<compile_context>
chip_gen: v5e
topology: v5e:2x2
jax: 0.10.0
libtpu: 0.0.40
codegen_flags: <defaults>
</compile_context>

<pallas_src>
import functools
import math

import jax
import jax.numpy as jnp
from jax.experimental import pallas as pl
from jax.experimental.pallas import tpu as pltpu


_INV_SQRT2 = 1.0 / math.sqrt(2.0)


def _full_sum(a):
    # full reduction kept rank-2 (1, 1): two single-axis reductions (lane, then
    # sublane) — robust lowering, no rank-0 intermediates.
    return jnp.sum(jnp.sum(a, axis=1, keepdims=True), axis=0, keepdims=True)


# -----------------------------------------------------------------------------
# Fused kernel: conv3x3 (im2col matmul) + GroupNorm + optional FiLM + exact GELU
# -----------------------------------------------------------------------------
def _block_kernel(x_ref, w_ref, b_ref, gamma_ref, beta_ref, *rest,
                  H, W, Cin, Cout, G, eps, film):
    if film:
        scale_ref, shift_ref, o_ref, patch_ref, conv_ref = rest
    else:
        scale_ref = shift_ref = None
        o_ref, patch_ref, conv_ref = rest

    HW = H * W
    Cpg = Cout // G

    # ---------------- 3x3 conv: im2col -> single MXU matmul -----------------
    # x_ref : (1, Cin, L) f32, L = (H+2)*W + 2.  Rows are zero-padded in H and
    #         flattened with stride W; one extra zero column on each end makes
    #         every tap offset (ky*W + kx - 1) an in-bounds static lane slice.
    # w_ref : (Cout, 9*Cin), index (ky*3 + kx)*Cin + ci (matches patch order).
    x = x_ref[0]                                             # (Cin, L)

    # wrap-around killers for the kx=0 / kx=2 taps (output-column masks)
    col = jax.lax.broadcasted_iota(jnp.int32, (1, HW), 1)
    wcol = col % W
    mask_l = jnp.where(wcol == 0, 0.0, 1.0).astype(jnp.float32)      # kx == 0
    mask_r = jnp.where(wcol == W - 1, 0.0, 1.0).astype(jnp.float32)  # kx == 2

    for ky in range(3):
        for kx in range(3):
            k = ky * 3 + kx
            off = ky * W + kx        # the "-1" of (kx-1) is folded into the pad col
            s = x[:, off:off + HW]   # (Cin, HW) static lane-offset slice
            if kx == 0:
                s = s * mask_l
            elif kx == 2:
                s = s * mask_r
            patch_ref[k * Cin:(k + 1) * Cin, :] = s

    rhs = patch_ref[...].astype(w_ref.dtype)                 # (9*Cin, HW)
    acc = jnp.dot(w_ref[...], rhs, preferred_element_type=jnp.float32)
    conv_ref[...] = acc + b_ref[...]                         # (Cout, HW) + (Cout, 1)

    # ------------- GroupNorm + optional FiLM + exact GELU (per group) -------
    inv_cnt = 1.0 / float(Cpg * HW)
    for g in range(G):
        gs = slice(g * Cpg, (g + 1) * Cpg)
        y = conv_ref[gs, :]                                  # (Cpg, HW) f32
        mean = _full_sum(y) * inv_cnt                        # (1, 1)
        ex2 = _full_sum(y * y) * inv_cnt
        var = jnp.maximum(ex2 - mean * mean, 0.0)            # clamp -> no NaN
        inv = jax.lax.rsqrt(var + eps)
        h = (y - mean) * inv * gamma_ref[gs, :] + beta_ref[gs, :]
        if film:
            h = h * (scale_ref[0, gs, :] + 1.0) + shift_ref[0, gs, :]
        gelu = 0.5 * h * (1.0 + jax.lax.erf(h * _INV_SQRT2))  # exact GELU
        o_ref[0, gs, :] = gelu.astype(o_ref.dtype)


# -----------------------------------------------------------------------------
# Wrapper: Block.forward
# -----------------------------------------------------------------------------
def block_forward(x_nchw, params, scale_shift=None, *, groups=8, eps=1e-5,
                  mxu_dtype=jnp.float32):
    """x_nchw: (N, Cin, H, W).  Returns (N, Cout, H, W) float32.

    mxu_dtype: dtype of the conv matmul operands (jnp.bfloat16 recommended on
    v6e/v7x); accumulation and all elementwise math stay in float32.
    """
    w = params["conv_w"]            # (Cout, Cin, 3, 3)  (PyTorch layout)
    b = params["conv_b"]            # (Cout,)
    gamma = params["gn_w"]          # (Cout,)
    beta = params["gn_b"]           # (Cout,)

    N, Cin, H, W = x_nchw.shape
    Cout = w.shape[0]
    G = groups
    assert Cout % G == 0
    HW = H * W
    L = (H + 2) * W + 2

    # Input stays channels-first (channels -> sublanes, spatial -> lanes).
    # Pad H only, flatten rows (stride W), add one zero column on each end.
    xf = jnp.pad(x_nchw.astype(jnp.float32), ((0, 0), (0, 0), (1, 1), (0, 0)))
    xf = xf.reshape(N, Cin, (H + 2) * W)
    xf = jnp.pad(xf, ((0, 0), (0, 0), (1, 1)))               # (N, Cin, L)

    # Weights tap-major to match the patch assembly: w2[co, (ky*3+kx)*Cin + ci]
    w2 = jnp.transpose(w, (0, 2, 3, 1)).reshape(Cout, 9 * Cin).astype(mxu_dtype)
    b2 = b.reshape(Cout, 1).astype(jnp.float32)
    gamma2 = gamma.reshape(Cout, 1).astype(jnp.float32)
    beta2 = beta.reshape(Cout, 1).astype(jnp.float32)

    film = scale_shift is not None
    inputs = [xf, w2, b2, gamma2, beta2]
    in_specs = [
        pl.BlockSpec((1, Cin, L), lambda n: (n, 0, 0)),
        pl.BlockSpec((Cout, 9 * Cin), lambda n: (0, 0)),
        pl.BlockSpec((Cout, 1), lambda n: (0, 0)),
        pl.BlockSpec((Cout, 1), lambda n: (0, 0)),
        pl.BlockSpec((Cout, 1), lambda n: (0, 0)),
    ]
    if film:
        scale, shift = scale_shift
        inputs += [scale.reshape(N, Cout, 1).astype(jnp.float32),
                   shift.reshape(N, Cout, 1).astype(jnp.float32)]
        in_specs += [pl.BlockSpec((1, Cout, 1), lambda n: (n, 0, 0)),
                     pl.BlockSpec((1, Cout, 1), lambda n: (n, 0, 0))]

    kernel = functools.partial(_block_kernel, H=H, W=W, Cin=Cin, Cout=Cout,
                               G=G, eps=eps, film=film)

    flops = 2 * N * HW * Cout * 9 * Cin + 12 * N * HW * Cout
    bytes_accessed = 4 * (N * Cin * L + Cout * (9 * Cin + 3)
                          + (2 * N * Cout if film else 0) + N * Cout * HW)

    out_flat = pl.pallas_call(
        kernel,
        out_shape=jax.ShapeDtypeStruct((N, Cout, HW), jnp.float32),
        grid_spec=pltpu.PrefetchScalarGridSpec(
            num_scalar_prefetch=0,
            grid=(N,),
            in_specs=in_specs,
            out_specs=pl.BlockSpec((1, Cout, HW), lambda n: (n, 0, 0)),
            scratch_shapes=[
                pltpu.VMEM((9 * Cin, HW), jnp.float32),   # im2col patch buffer
                pltpu.VMEM((Cout, HW), jnp.float32),      # conv result (never hits HBM)
            ],
        ),
        compiler_params=pltpu.CompilerParams(
            dimension_semantics=("parallel",),            # grid over N: both v7x TCs busy
            vmem_limit_bytes=32 * 1024 * 1024,
        ),
        cost_estimate=pl.CostEstimate(flops=flops,
                                      transcendentals=N * HW * Cout,
                                      bytes_accessed=bytes_accessed),
    )(*inputs)

    # Layout already matches NCHW contiguity -> metadata-only reshape.
    return out_flat.reshape(N, Cout, H, W)


# -----------------------------------------------------------------------------
# Pure-JAX reference (sanity check)
# -----------------------------------------------------------------------------
def block_forward_ref(x_nchw, params, scale_shift=None, *, groups=8, eps=1e-5):
    w, b = params["conv_w"], params["conv_b"]
    gamma, beta = params["gn_w"], params["gn_b"]
    N, Cin, H, W = x_nchw.shape
    Cout = w.shape[0]
    y = jax.lax.conv_general_dilated(
        x_nchw, w, window_strides=(1, 1), padding=((1, 1), (1, 1)),
        dimension_numbers=("NCHW", "OIHW", "NCHW"))
    y = y + b.reshape(1, Cout, 1, 1)
    yg = y.reshape(N, groups, Cout // groups, H, W)
    mean = yg.mean(axis=(2, 3, 4), keepdims=True)
    var = yg.var(axis=(2, 3, 4), keepdims=True)
    yn = ((yg - mean) / jnp.sqrt(var + eps)).reshape(N, Cout, H, W)
    yn = yn * gamma.reshape(1, Cout, 1, 1) + beta.reshape(1, Cout, 1, 1)
    if scale_shift is not None:
        scale, shift = scale_shift
        yn = yn * (scale.reshape(N, Cout, 1, 1) + 1.0) + shift.reshape(N, Cout, 1, 1)
    return jax.nn.gelu(yn, approximate=False)


if __name__ == "__main__":
    # small shapes consistent with the module
    N, Cin, Cout, H, W, G = 2, 4, 16, 16, 16, 8

    key = jax.random.PRNGKey(0)
    k1, k2, k3, k4, k5 = jax.random.split(key, 5)

    fan_in = Cin * 3 * 3
    params = {
        "conv_w": jax.random.normal(k1, (Cout, Cin, 3, 3), jnp.float32) / math.sqrt(fan_in),
        "conv_b": jax.random.normal(k2, (Cout,), jnp.float32) * 0.1,
        "gn_w": jnp.ones((Cout,), jnp.float32),    # PyTorch GroupNorm default init
        "gn_b": jnp.zeros((Cout,), jnp.float32),
    }

    x = jax.random.normal(k3, (N, Cin, H, W), jnp.float32)
    scale = jax.random.normal(k4, (N, Cout, 1, 1), jnp.float32) * 0.2
    shift = jax.random.normal(k5, (N, Cout, 1, 1), jnp.float32) * 0.2

    # with scale_shift (FiLM path)
    out = jax.block_until_ready(block_forward(x, params, (scale, shift), groups=G))
    ref = block_forward_ref(x, params, (scale, shift), groups=G)
    assert out.shape == (N, Cout, H, W)
    assert jnp.allclose(out, ref, atol=1e-4, rtol=1e-4)

    # without scale_shift (statically compiled no-FiLM variant)
    out2 = jax.block_until_ready(block_forward(x, params, None, groups=G))
    ref2 = block_forward_ref(x, params, None, groups=G)
    assert jnp.allclose(out2, ref2, atol=1e-4, rtol=1e-4)

    # bf16 MXU-operand path (recommended on v6e/v7x), f32 accumulation
    out3 = jax.block_until_ready(
        block_forward(x, params, (scale, shift), groups=G, mxu_dtype=jnp.bfloat16))
    assert float(jnp.max(jnp.abs(out3 - ref))) < 0.1

    print("KERNEL_OK")
</pallas_src>

<mosaic_0001>
module attributes {stable_mosaic.version = 11 : i64} {
  func.func @_block_kernel(%arg0: i32, %arg1: memref<1x4x290xf32, #tpu.memory_space<vmem>>, %arg2: memref<16x36xf32, #tpu.memory_space<vmem>>, %arg3: memref<16x1xf32, #tpu.memory_space<vmem>>, %arg4: memref<16x1xf32, #tpu.memory_space<vmem>>, %arg5: memref<16x1xf32, #tpu.memory_space<vmem>>, %arg6: memref<1x16x1xf32, #tpu.memory_space<vmem>>, %arg7: memref<1x16x1xf32, #tpu.memory_space<vmem>>, %arg8: memref<1x16x256xf32, #tpu.memory_space<vmem>>, %arg9: memref<36x256xf32, #tpu.memory_space<vmem>>, %arg10: memref<16x256xf32, #tpu.memory_space<vmem>>) attributes {dimension_semantics = [#tpu.dimension_semantics<parallel>], iteration_bounds = array<i64: 2>, scalar_prefetch = 0 : i64, scratch_operands = 2 : i64, tpu.core_type = #tpu.core_type<tc>, window_params = [{transform_indices = @transform_0, window_bounds = array<i64: 1, 4, 290>}, {pipeline_mode = #tpu.pipeline_mode<synchronous>, transform_indices = @transform_1, window_bounds = array<i64: 16, 36>}, {pipeline_mode = #tpu.pipeline_mode<synchronous>, transform_indices = @transform_2, window_bounds = array<i64: 16, 1>}, {pipeline_mode = #tpu.pipeline_mode<synchronous>, transform_indices = @transform_3, window_bounds = array<i64: 16, 1>}, {pipeline_mode = #tpu.pipeline_mode<synchronous>, transform_indices = @transform_4, window_bounds = array<i64: 16, 1>}, {transform_indices = @transform_5, window_bounds = array<i64: 1, 16, 1>}, {transform_indices = @transform_6, window_bounds = array<i64: 1, 16, 1>}, {transform_indices = @transform_7, window_bounds = array<i64: 1, 16, 256>}]} {
    %c0 = arith.constant 0 : index
    %c0_0 = arith.constant 0 : index
    %c0_1 = arith.constant 0 : index
    %0 = vector.load %arg1[%c0, %c0_0, %c0_1] : memref<1x4x290xf32, #tpu.memory_space<vmem>>, vector<1x4x290xf32>
    %1 = vector.shape_cast %0 : vector<1x4x290xf32> to vector<4x290xf32>
    %2 = tpu.iota {dimensions = array<i32: 1>} : vector<1x256xi32>
    %c16_i32 = arith.constant 16 : i32
    %c0_i32 = arith.constant 0 : i32
    %3 = arith.cmpi eq, %c16_i32, %c0_i32 : i32
    %c1_i32 = arith.constant 1 : i32
    %4 = arith.select %3, %c1_i32, %c16_i32 : i32
    %5 = vector.broadcast %4 : i32 to vector<1x256xi32>
    %6 = arith.remsi %2, %5 : vector<1x256xi32>
    %c0_i32_2 = arith.constant 0 : i32
    %7 = vector.broadcast %c0_i32_2 : i32 to vector<1x256xi32>
    %8 = arith.cmpi ne, %6, %7 : vector<1x256xi32>
    %c0_i32_3 = arith.constant 0 : i32
    %9 = vector.broadcast %c0_i32_3 : i32 to vector<1x256xi32>
    %10 = arith.cmpi slt, %6, %9 : vector<1x256xi32>
    %c0_i32_4 = arith.constant 0 : i32
    %11 = arith.cmpi slt, %4, %c0_i32_4 : i32
    %12 = vector.broadcast %11 : i1 to vector<1x256xi1>
    %13 = vector.broadcast %12 : vector<1x256xi1> to vector<1x256xi1>
    %14 = arith.xori %10, %13 : vector<1x256xi1>
    %15 = arith.andi %14, %8 : vector<1x256xi1>
    %16 = vector.broadcast %4 : i32 to vector<1x256xi32>
    %17 = arith.addi %6, %16 : vector<1x256xi32>
    %18 = arith.select %15, %17, %6 : vector<1x256xi1>, vector<1x256xi32>
    %c0_i32_5 = arith.constant 0 : i32
    %19 = vector.broadcast %c0_i32_5 : i32 to vector<1x256xi32>
    %20 = arith.cmpi eq, %18, %19 : vector<1x256xi32>
    %cst = arith.constant 0.000000e+00 : f32
    %cst_6 = arith.constant 1.000000e+00 : f32
    %21 = vector.broadcast %cst : f32 to vector<1x256xf32>
    %22 = vector.broadcast %cst_6 : f32 to vector<1x256xf32>
    %23 = arith.select %20, %21, %22 : vector<1x256xi1>, vector<1x256xf32>
    %c15_i32 = arith.constant 15 : i32
    %24 = vector.broadcast %c15_i32 : i32 to vector<1x256xi32>
    %25 = arith.cmpi eq, %18, %24 : vector<1x256xi32>
    %cst_7 = arith.constant 0.000000e+00 : f32
    %cst_8 = arith.constant 1.000000e+00 : f32
    %26 = vector.broadcast %cst_7 : f32 to vector<1x256xf32>
    %27 = vector.broadcast %cst_8 : f32 to vector<1x256xf32>
    %28 = arith.select %25, %26, %27 : vector<1x256xi1>, vector<1x256xf32>
    %29 = vector.extract_strided_slice %1 {offsets = [0, 0], sizes = [4, 256], strides = [1, 1]} : vector<4x290xf32> to vector<4x256xf32>
    %30 = vector.broadcast %23 : vector<1x256xf32> to vector<4x256xf32>
    %31 = arith.mulf %29, %30 : vector<4x256xf32>
    %c0_9 = arith.constant 0 : index
    %c0_10 = arith.constant 0 : index
    %32 = vector.load %arg9[%c0_9, %c0_10] : memref<36x256xf32, #tpu.memory_space<vmem>>, vector<4x256xf32>
    tpu.vector_store %arg9[%c0_9, %c0_10], %31 {strides = array<i32>} : memref<36x256xf32, #tpu.memory_space<vmem>>, vector<4x256xf32>,
    %33 = vector.extract_strided_slice %1 {offsets = [0, 1], sizes = [4, 256], strides = [1, 1]} : vector<4x290xf32> to vector<4x256xf32>
    %c4 = arith.constant 4 : index
    %c0_11 = arith.constant 0 : index
    %34 = vector.load %arg9[%c4, %c0_11] : memref<36x256xf32, #tpu.memory_space<vmem>>, vector<4x256xf32>
    tpu.vector_store %arg9[%c4, %c0_11], %33 {strides = array<i32>} : memref<36x256xf32, #tpu.memory_space<vmem>>, vector<4x256xf32>,
    %35 = vector.extract_strided_slice %1 {offsets = [0, 2], sizes = [4, 256], strides = [1, 1]} : vector<4x290xf32> to vector<4x256xf32>
    %36 = vector.broadcast %28 : vector<1x256xf32> to vector<4x256xf32>
    %37 = arith.mulf %35, %36 : vector<4x256xf32>
    %c8 = arith.constant 8 : index
    %c0_12 = arith.constant 0 : index
    %38 = vector.load %arg9[%c8, %c0_12] : memref<36x256xf32, #tpu.memory_space<vmem>>, vector<4x256xf32>
    tpu.vector_store %arg9[%c8, %c0_12], %37 {strides = array<i32>} : memref<36x256xf32, #tpu.memory_space<vmem>>, vector<4x256xf32>,
    %39 = vector.extract_strided_slice %1 {offsets = [0, 16], sizes = [4, 256], strides = [1, 1]} : vector<4x290xf32> to vector<4x256xf32>
    %40 = vector.broadcast %23 : vector<1x256xf32> to vector<4x256xf32>
    %41 = arith.mulf %39, %40 : vector<4x256xf32>
    %c12 = arith.constant 12 : index
    %c0_13 = arith.constant 0 : index
    %42 = vector.load %arg9[%c12, %c0_13] : memref<36x256xf32, #tpu.memory_space<vmem>>, vector<4x256xf32>
    tpu.vector_store %arg9[%c12, %c0_13], %41 {strides = array<i32>} : memref<36x256xf32, #tpu.memory_space<vmem>>, vector<4x256xf32>,
    %43 = vector.extract_strided_slice %1 {offsets = [0, 17], sizes = [4, 256], strides = [1, 1]} : vector<4x290xf32> to vector<4x256xf32>
    %c16 = arith.constant 16 : index
    %c0_14 = arith.constant 0 : index
    %44 = vector.load %arg9[%c16, %c0_14] : memref<36x256xf32, #tpu.memory_space<vmem>>, vector<4x256xf32>
    tpu.vector_store %arg9[%c16, %c0_14], %43 {strides = array<i32>} : memref<36x256xf32, #tpu.memory_space<vmem>>, vector<4x256xf32>,
    %45 = vector.extract_strided_slice %1 {offsets = [0, 18], sizes = [4, 256], strides = [1, 1]} : vector<4x290xf32> to vector<4x256xf32>
    %46 = vector.broadcast %28 : vector<1x256xf32> to vector<4x256xf32>
    %47 = arith.mulf %45, %46 : vector<4x256xf32>
    %c20 = arith.constant 20 : index
    %c0_15 = arith.constant 0 : index
    %48 = vector.load %arg9[%c20, %c0_15] : memref<36x256xf32, #tpu.memory_space<vmem>>, vector<4x256xf32>
    tpu.vector_store %arg9[%c20, %c0_15], %47 {strides = array<i32>} : memref<36x256xf32, #tpu.memory_space<vmem>>, vector<4x256xf32>,
    %49 = vector.extract_strided_slice %1 {offsets = [0, 32], sizes = [4, 256], strides = [1, 1]} : vector<4x290xf32> to vector<4x256xf32>
    %50 = vector.broadcast %23 : vector<1x256xf32> to vector<4x256xf32>
    %51 = arith.mulf %49, %50 : vector<4x256xf32>
    %c24 = arith.constant 24 : index
    %c0_16 = arith.constant 0 : index
    %52 = vector.load %arg9[%c24, %c0_16] : memref<36x256xf32, #tpu.memory_space<vmem>>, vector<4x256xf32>
    tpu.vector_store %arg9[%c24, %c0_16], %51 {strides = array<i32>} : memref<36x256xf32, #tpu.memory_space<vmem>>, vector<4x256xf32>,
    %53 = vector.extract_strided_slice %1 {offsets = [0, 33], sizes = [4, 256], strides = [1, 1]} : vector<4x290xf32> to vector<4x256xf32>
    %c28 = arith.constant 28 : index
    %c0_17 = arith.constant 0 : index
    %54 = vector.load %arg9[%c28, %c0_17] : memref<36x256xf32, #tpu.memory_space<vmem>>, vector<4x256xf32>
    tpu.vector_store %arg9[%c28, %c0_17], %53 {strides = array<i32>} : memref<36x256xf32, #tpu.memory_space<vmem>>, vector<4x256xf32>,
    %55 = vector.extract_strided_slice %1 {offsets = [0, 34], sizes = [4, 256], strides = [1, 1]} : vector<4x290xf32> to vector<4x256xf32>
    %56 = vector.broadcast %28 : vector<1x256xf32> to vector<4x256xf32>
    %57 = arith.mulf %55, %56 : vector<4x256xf32>
    %c32 = arith.constant 32 : index
    %c0_18 = arith.constant 0 : index
    %58 = vector.load %arg9[%c32, %c0_18] : memref<36x256xf32, #tpu.memory_space<vmem>>, vector<4x256xf32>
    tpu.vector_store %arg9[%c32, %c0_18], %57 {strides = array<i32>} : memref<36x256xf32, #tpu.memory_space<vmem>>, vector<4x256xf32>,
    %c0_19 = arith.constant 0 : index
    %c0_20 = arith.constant 0 : index
    %59 = vector.load %arg9[%c0_19, %c0_20] : memref<36x256xf32, #tpu.memory_space<vmem>>, vector<36x256xf32>
    %c0_21 = arith.constant 0 : index
    %c0_22 = arith.constant 0 : index
    %60 = vector.load %arg2[%c0_21, %c0_22] : memref<16x36xf32, #tpu.memory_space<vmem>>, vector<16x36xf32>
    %cst_23 = arith.constant dense<0.000000e+00> : vector<16x256xf32>
    %61 = tpu.matmul %60, %59, %cst_23 {dimension_numbers = #tpu.dot_dimension_numbers<[1], [0], [0], [1], [0, 0, 1, 1], [], []>} : vector<16x36xf32>, vector<36x256xf32>, vector<16x256xf32> -> vector<16x256xf32>
    %c0_24 = arith.constant 0 : index
    %c0_25 = arith.constant 0 : index
    %62 = vector.load %arg3[%c0_24, %c0_25] : memref<16x1xf32, #tpu.memory_space<vmem>>, vector<16x1xf32>
    %63 = vector.broadcast %62 : vector<16x1xf32> to vector<16x256xf32>
    %64 = arith.addf %61, %63 : vector<16x256xf32>
    %c0_26 = arith.constant 0 : index
    %c0_27 = arith.constant 0 : index
    %65 = vector.load %arg10[%c0_26, %c0_27] : memref<16x256xf32, #tpu.memory_space<vmem>>, vector<16x256xf32>
    tpu.vector_store %arg10[%c0_26, %c0_27], %64 {strides = array<i32>} : memref<16x256xf32, #tpu.memory_space<vmem>>, vector<16x256xf32>,
    %c0_28 = arith.constant 0 : index
    %c0_29 = arith.constant 0 : index
    %66 = vector.load %arg10[%c0_28, %c0_29] : memref<16x256xf32, #tpu.memory_space<vmem>>, vector<2x256xf32>
    %cst_30 = arith.constant dense<0.000000e+00> : vector<2xf32>
    %67 = vector.multi_reduction <add>, %66, %cst_30 [1] : vector<2x256xf32> to vector<2xf32>
    %68 = vector.shape_cast %67 : vector<2xf32> to vector<2x1xf32>
    %cst_31 = arith.constant dense<0.000000e+00> : vector<1xf32>
    %69 = vector.multi_reduction <add>, %68, %cst_31 [0] : vector<2x1xf32> to vector<1xf32>
    %70 = vector.shape_cast %69 : vector<1xf32> to vector<1x1xf32>
    %cst_32 = arith.constant 0.001953125 : f32
    %71 = vector.broadcast %cst_32 : f32 to vector<1x1xf32>
    %72 = arith.mulf %70, %71 : vector<1x1xf32>
    %73 = arith.mulf %66, %66 : vector<2x256xf32>
    %cst_33 = arith.constant dense<0.000000e+00> : vector<2xf32>
    %74 = vector.multi_reduction <add>, %73, %cst_33 [1] : vector<2x256xf32> to vector<2xf32>
    %75 = vector.shape_cast %74 : vector<2xf32> to vector<2x1xf32>
    %cst_34 = arith.constant dense<0.000000e+00> : vector<1xf32>
    %76 = vector.multi_reduction <add>, %75, %cst_34 [0] : vector<2x1xf32> to vector<1xf32>
    %77 = vector.shape_cast %76 : vector<1xf32> to vector<1x1xf32>
    %cst_35 = arith.constant 0.001953125 : f32
    %78 = vector.broadcast %cst_35 : f32 to vector<1x1xf32>
    %79 = arith.mulf %77, %78 : vector<1x1xf32>
    %80 = arith.mulf %72, %72 : vector<1x1xf32>
    %81 = arith.subf %79, %80 : vector<1x1xf32>
    %cst_36 = arith.constant 0.000000e+00 : f32
    %82 = vector.broadcast %cst_36 : f32 to vector<1x1xf32>
    %83 = arith.maximumf %81, %82 : vector<1x1xf32>
    %cst_37 = arith.constant 9.99999974E-6 : f32
    %84 = vector.broadcast %cst_37 : f32 to vector<1x1xf32>
    %85 = arith.addf %83, %84 : vector<1x1xf32>
    %86 = math.rsqrt %85 : vector<1x1xf32>
    %87 = vector.broadcast %72 : vector<1x1xf32> to vector<2x256xf32>
    %88 = arith.subf %66, %87 : vector<2x256xf32>
    %89 = vector.broadcast %86 : vector<1x1xf32> to vector<2x256xf32>
    %90 = arith.mulf %88, %89 : vector<2x256xf32>
    %c0_38 = arith.constant 0 : index
    %c0_39 = arith.constant 0 : index
    %91 = vector.load %arg4[%c0_38, %c0_39] : memref<16x1xf32, #tpu.memory_space<vmem>>, vector<2x1xf32>
    %92 = vector.broadcast %91 : vector<2x1xf32> to vector<2x256xf32>
    %93 = arith.mulf %90, %92 : vector<2x256xf32>
    %c0_40 = arith.constant 0 : index
    %c0_41 = arith.constant 0 : index
    %94 = vector.load %arg5[%c0_40, %c0_41] : memref<16x1xf32, #tpu.memory_space<vmem>>, vector<2x1xf32>
    %95 = vector.broadcast %94 : vector<2x1xf32> to vector<2x256xf32>
    %96 = arith.addf %93, %95 : vector<2x256xf32>
    %c0_42 = arith.constant 0 : index
    %c0_43 = arith.constant 0 : index
    %c0_44 = arith.constant 0 : index
    %97 = vector.load %arg6[%c0_42, %c0_43, %c0_44] : memref<1x16x1xf32, #tpu.memory_space<vmem>>, vector<1x2x1xf32>
    %98 = vector.shape_cast %97 : vector<1x2x1xf32> to vector<2x1xf32>
    %cst_45 = arith.constant 1.000000e+00 : f32
    %99 = vector.broadcast %cst_45 : f32 to vector<2x1xf32>
    %100 = arith.addf %98, %99 : vector<2x1xf32>
    %101 = vector.broadcast %100 : vector<2x1xf32> to vector<2x256xf32>
    %102 = arith.mulf %96, %101 : vector<2x256xf32>
    %c0_46 = arith.constant 0 : index
    %c0_47 = arith.constant 0 : index
    %c0_48 = arith.constant 0 : index
    %103 = vector.load %arg7[%c0_46, %c0_47, %c0_48] : memref<1x16x1xf32, #tpu.memory_space<vmem>>, vector<1x2x1xf32>
    %104 = vector.shape_cast %103 : vector<1x2x1xf32> to vector<2x1xf32>
    %105 = vector.broadcast %104 : vector<2x1xf32> to vector<2x256xf32>
    %106 = arith.addf %102, %105 : vector<2x256xf32>
    %cst_49 = arith.constant 5.000000e-01 : f32
    %107 = vector.broadcast %cst_49 : f32 to vector<2x256xf32>
    %108 = arith.mulf %107, %106 : vector<2x256xf32>
    %cst_50 = arith.constant 0.707106769 : f32
    %109 = vector.broadcast %cst_50 : f32 to vector<2x256xf32>
    %110 = arith.mulf %106, %109 : vector<2x256xf32>
    %111 = math.erf %110 : vector<2x256xf32>
    %cst_51 = arith.constant 1.000000e+00 : f32
    %112 = vector.broadcast %cst_51 : f32 to vector<2x256xf32>
    %113 = arith.addf %112, %111 : vector<2x256xf32>
    %114 = arith.mulf %108, %113 : vector<2x256xf32>
    %c0_52 = arith.constant 0 : index
    %c0_53 = arith.constant 0 : index
    %c0_54 = arith.constant 0 : index
    %115 = vector.load %arg8[%c0_52, %c0_53, %c0_54] : memref<1x16x256xf32, #tpu.memory_space<vmem>>, vector<1x2x256xf32>
    %116 = vector.shape_cast %115 : vector<1x2x256xf32> to vector<2x256xf32>
    %117 = vector.shape_cast %114 : vector<2x256xf32> to vector<1x2x256xf32>
    tpu.vector_store %arg8[%c0_52, %c0_53, %c0_54], %117 {strides = array<i32>} : memref<1x16x256xf32, #tpu.memory_space<vmem>>, vector<1x2x256xf32>,
    %c2 = arith.constant 2 : index
    %c0_55 = arith.constant 0 : index
    %118 = vector.load %arg10[%c2, %c0_55] : memref<16x256xf32, #tpu.memory_space<vmem>>, vector<2x256xf32>
    %cst_56 = arith.constant dense<0.000000e+00> : vector<2xf32>
    %119 = vector.multi_reduction <add>, %118, %cst_56 [1] : vector<2x256xf32> to vector<2xf32>
    %120 = vector.shape_cast %119 : vector<2xf32> to vector<2x1xf32>
    %cst_57 = arith.constant dense<0.000000e+00> : vector<1xf32>
    %121 = vector.multi_reduction <add>, %120, %cst_57 [0] : vector<2x1xf32> to vector<1xf32>
    %122 = vector.shape_cast %121 : vector<1xf32> to vector<1x1xf32>
    %cst_58 = arith.constant 0.001953125 : f32
    %123 = vector.broadcast %cst_58 : f32 to vector<1x1xf32>
    %124 = arith.mulf %122, %123 : vector<1x1xf32>
    %125 = arith.mulf %118, %118 : vector<2x256xf32>
    %cst_59 = arith.constant dense<0.000000e+00> : vector<2xf32>
    %126 = vector.multi_reduction <add>, %125, %cst_59 [1] : vector<2x256xf32> to vector<2xf32>
    %127 = vector.shape_cast %126 : vector<2xf32> to vector<2x1xf32>
    %cst_60 = arith.constant dense<0.000000e+00> : vector<1xf32>
    %128 = vector.multi_reduction <add>, %127, %cst_60 [0] : vector<2x1xf32> to vector<1xf32>
    %129 = vector.shape_cast %128 : vector<1xf32> to vector<1x1xf32>
    %cst_61 = arith.constant 0.001953125 : f32
    %130 = vector.broadcast %cst_61 : f32 to vector<1x1xf32>
    %131 = arith.mulf %129, %130 : vector<1x1xf32>
    %132 = arith.mulf %124, %124 : vector<1x1xf32>
    %133 = arith.subf %131, %132 : vector<1x1xf32>
    %cst_62 = arith.constant 0.000000e+00 : f32
    %134 = vector.broadcast %cst_62 : f32 to vector<1x1xf32>
    %135 = arith.maximumf %133, %134 : vector<1x1xf32>
    %cst_63 = arith.constant 9.99999974E-6 : f32
    %136 = vector.broadcast %cst_63 : f32 to vector<1x1xf32>
    %137 = arith.addf %135, %136 : vector<1x1xf32>
    %138 = math.rsqrt %137 : vector<1x1xf32>
    %139 = vector.broadcast %124 : vector<1x1xf32> to vector<2x256xf32>
    %140 = arith.subf %118, %139 : vector<2x256xf32>
    %141 = vector.broadcast %138 : vector<1x1xf32> to vector<2x256xf32>
    %142 = arith.mulf %140, %141 : vector<2x256xf32>
    %c2_64 = arith.constant 2 : index
    %c0_65 = arith.constant 0 : index
    %143 = vector.load %arg4[%c2_64, %c0_65] : memref<16x1xf32, #tpu.memory_space<vmem>>, vector<2x1xf32>
    %144 = vector.broadcast %143 : vector<2x1xf32> to vector<2x256xf32>
    %145 = arith.mulf %142, %144 : vector<2x256xf32>
    %c2_66 = arith.constant 2 : index
    %c0_67 = arith.constant 0 : index
    %146 = vector.load %arg5[%c2_66, %c0_67] : memref<16x1xf32, #tpu.memory_space<vmem>>, vector<2x1xf32>
    %147 = vector.broadcast %146 : vector<2x1xf32> to vector<2x256xf32>
    %148 = arith.addf %145, %147 : vector<2x256xf32>
    %c0_68 = arith.constant 0 : index
    %c2_69 = arith.constant 2 : index
    %c0_70 = arith.constant 0 : index
    %149 = vector.load %arg6[%c0_68, %c2_69, %c0_70] : memref<1x16x1xf32, #tpu.memory_space<vmem>>, vector<1x2x1xf32>
    %150 = vector.shape_cast %149 : vector<1x2x1xf32> to vector<2x1xf32>
    %cst_71 = arith.constant 1.000000e+00 : f32
    %151 = vector.broadcast %cst_71 : f32 to vector<2x1xf32>
    %152 = arith.addf %150, %151 : vector<2x1xf32>
    %153 = vector.broadcast %152 : vector<2x1xf32> to vector<2x256xf32>
    %154 = arith.mulf %148, %153 : vector<2x256xf32>
    %c0_72 = arith.constant 0 : index
    %c2_73 = arith.constant 2 : index
    %c0_74 = arith.constant 0 : index
    %155 = vector.load %arg7[%c0_72, %c2_73, %c0_74] : memref<1x16x1xf32, #tpu.memory_space<vmem>>, vector<1x2x1xf32>
    %156 = vector.shape_cast %155 : vector<1x2x1xf32> to vector<2x1xf32>
    %157 = vector.broadcast %156 : vector<2x1xf32> to vector<2x256xf32>
    %158 = arith.addf %154, %157 : vector<2x256xf32>
    %cst_75 = arith.constant 5.000000e-01 : f32
    %159 = vector.broadcast %cst_75 : f32 to vector<2x256xf32>
    %160 = arith.mulf %159, %158 : vector<2x256xf32>
    %cst_76 = arith.constant 0.707106769 : f32
    %161 = vector.broadcast %cst_76 : f32 to vector<2x256xf32>
    %162 = arith.mulf %158, %161 : vector<2x256xf32>
    %163 = math.erf %162 : vector<2x256xf32>
    %cst_77 = arith.constant 1.000000e+00 : f32
    %164 = vector.broadcast %cst_77 : f32 to vector<2x256xf32>
    %165 = arith.addf %164, %163 : vector<2x256xf32>
    %166 = arith.mulf %160, %165 : vector<2x256xf32>
    %c0_78 = arith.constant 0 : index
    %c2_79 = arith.constant 2 : index
    %c0_80 = arith.constant 0 : index
    %167 = vector.load %arg8[%c0_78, %c2_79, %c0_80] : memref<1x16x256xf32, #tpu.memory_space<vmem>>, vector<1x2x256xf32>
    %168 = vector.shape_cast %167 : vector<1x2x256xf32> to vector<2x256xf32>
    %169 = vector.shape_cast %166 : vector<2x256xf32> to vector<1x2x256xf32>
    tpu.vector_store %arg8[%c0_78, %c2_79, %c0_80], %169 {strides = array<i32>} : memref<1x16x256xf32, #tpu.memory_space<vmem>>, vector<1x2x256xf32>,
    %c4_81 = arith.constant 4 : index
    %c0_82 = arith.constant 0 : index
    %170 = vector.load %arg10[%c4_81, %c0_82] : memref<16x256xf32, #tpu.memory_space<vmem>>, vector<2x256xf32>
    %cst_83 = arith.constant dense<0.000000e+00> : vector<2xf32>
    %171 = vector.multi_reduction <add>, %170, %cst_83 [1] : vector<2x256xf32> to vector<2xf32>
    %172 = vector.shape_cast %171 : vector<2xf32> to vector<2x1xf32>
    %cst_84 = arith.constant dense<0.000000e+00> : vector<1xf32>
    %173 = vector.multi_reduction <add>, %172, %cst_84 [0] : vector<2x1xf32> to vector<1xf32>
    %174 = vector.shape_cast %173 : vector<1xf32> to vector<1x1xf32>
    %cst_85 = arith.constant 0.001953125 : f32
    %175 = vector.broadcast %cst_85 : f32 to vector<1x1xf32>
    %176 = arith.mulf %174, %175 : vector<1x1xf32>
    %177 = arith.mulf %170, %170 : vector<2x256xf32>
    %cst_86 = arith.constant dense<0.000000e+00> : vector<2xf32>
    %178 = vector.multi_reduction <add>, %177, %cst_86 [1] : vector<2x256xf32> to vector<2xf32>
    %179 = vector.shape_cast %178 : vector<2xf32> to vector<2x1xf32>
    %cst_87 = arith.constant dense<0.000000e+00> : vector<1xf32>
    %180 = vector.multi_reduction <add>, %179, %cst_87 [0] : vector<2x1xf32> to vector<1xf32>
    %181 = vector.shape_cast %180 : vector<1xf32> to vector<1x1xf32>
    %cst_88 = arith.constant 0.001953125 : f32
    %182 = vector.broadcast %cst_88 : f32 to vector<1x1xf32>
    %183 = arith.mulf %181, %182 : vector<1x1xf32>
    %184 = arith.mulf %176, %176 : vector<1x1xf32>
    %185 = arith.subf %183, %184 : vector<1x1xf32>
    %cst_89 = arith.constant 0.000000e+00 : f32
    %186 = vector.broadcast %cst_89 : f32 to vector<1x1xf32>
    %187 = arith.maximumf %185, %186 : vector<1x1xf32>
    %cst_90 = arith.constant 9.99999974E-6 : f32
    %188 = vector.broadcast %cst_90 : f32 to vector<1x1xf32>
    %189 = arith.addf %187, %188 : vector<1x1xf32>
    %190 = math.rsqrt %189 : vector<1x1xf32>
    %191 = vector.broadcast %176 : vector<1x1xf32> to vector<2x256xf32>
    %192 = arith.subf %170, %191 : vector<2x256xf32>
    %193 = vector.broadcast %190 : vector<1x1xf32> to vector<2x256xf32>
    %194 = arith.mulf %192, %193 : vector<2x256xf32>
    %c4_91 = arith.constant 4 : index
    %c0_92 = arith.constant 0 : index
    %195 = vector.load %arg4[%c4_91, %c0_92] : memref<16x1xf32, #tpu.memory_space<vmem>>, vector<2x1xf32>
    %196 = vector.broadcast %195 : vector<2x1xf32> to vector<2x256xf32>
    %197 = arith.mulf %194, %196 : vector<2x256xf32>
    %c4_93 = arith.constant 4 : index
    %c0_94 = arith.constant 0 : index
    %198 = vector.load %arg5[%c4_93, %c0_94] : memref<16x1xf32, #tpu.memory_space<vmem>>, vector<2x1xf32>
    %199 = vector.broadcast %198 : vector<2x1xf32> to vector<2x256xf32>
    %200 = arith.addf %197, %199 : vector<2x256xf32>
    %c0_95 = arith.constant 0 : index
    %c4_96 = arith.constant 4 : index
    %c0_97 = arith.constant 0 : index
    %201 = vector.load %arg6[%c0_95, %c4_96, %c0_97] : memref<1x16x1xf32, #tpu.memory_space<vmem>>, vector<1x2x1xf32>
    %202 = vector.shape_cast %201 : vector<1x2x1xf32> to vector<2x1xf32>
    %cst_98 = arith.constant 1.000000e+00 : f32
    %203 = vector.broadcast %cst_98 : f32 to vector<2x1xf32>
    %204 = arith.addf %202, %203 : vector<2x1xf32>
    %205 = vector.broadcast %204 : vector<2x1xf32> to vector<2x256xf32>
    %206 = arith.mulf %200, %205 : vector<2x256xf32>
    %c0_99 = arith.constant 0 : index
    %c4_100 = arith.constant 4 : index
    %c0_101 = arith.constant 0 : index
    %207 = vector.load %arg7[%c0_99, %c4_100, %c0_101] : memref<1x16x1xf32, #tpu.memory_space<vmem>>, vector<1x2x1xf32>
    %208 = vector.shape_cast %207 : vector<1x2x1xf32> to vector<2x1xf32>
    %209 = vector.broadcast %208 : vector<2x1xf32> to vector<2x256xf32>
    %210 = arith.addf %206, %209 : vector<2x256xf32>
    %cst_102 = arith.constant 5.000000e-01 : f32
    %211 = vector.broadcast %cst_102 : f32 to vector<2x256xf32>
    %212 = arith.mulf %211, %210 : vector<2x256xf32>
    %cst_103 = arith.constant 0.707106769 : f32
    %213 = vector.broadcast %cst_103 : f32 to vector<2x256xf32>
    %214 = arith.mulf %210, %213 : vector<2x256xf32>
    %215 = math.erf %214 : vector<2x256xf32>
    %cst_104 = arith.constant 1.000000e+00 : f32
    %216 = vector.broadcast %cst_104 : f32 to vector<2x256xf32>
    %217 = arith.addf %216, %215 : vector<2x256xf32>
    %218 = arith.mulf %212, %217 : vector<2x256xf32>
    %c0_105 = arith.constant 0 : index
    %c4_106 = arith.constant 4 : index
    %c0_107 = arith.constant 0 : index
    %219 = vector.load %arg8[%c0_105, %c4_106, %c0_107] : memref<1x16x256xf32, #tpu.memory_space<vmem>>, vector<1x2x256xf32>
    %220 = vector.shape_cast %219 : vector<1x2x256xf32> to vector<2x256xf32>
    %221 = vector.shape_cast %218 : vector<2x256xf32> to vector<1x2x256xf32>
    tpu.vector_store %arg8[%c0_105, %c4_106, %c0_107], %221 {strides = array<i32>} : memref<1x16x256xf32, #tpu.memory_space<vmem>>, vector<1x2x256xf32>,
    %c6 = arith.constant 6 : index
    %c0_108 = arith.constant 0 : index
    %222 = vector.load %arg10[%c6, %c0_108] : memref<16x256xf32, #tpu.memory_space<vmem>>, vector<2x256xf32>
    %cst_109 = arith.constant dense<0.000000e+00> : vector<2xf32>
    %223 = vector.multi_reduction <add>, %222, %cst_109 [1] : vector<2x256xf32> to vector<2xf32>
    %224 = vector.shape_cast %223 : vector<2xf32> to vector<2x1xf32>
    %cst_110 = arith.constant dense<0.000000e+00> : vector<1xf32>
    %225 = vector.multi_reduction <add>, %224, %cst_110 [0] : vector<2x1xf32> to vector<1xf32>
    %226 = vector.shape_cast %225 : vector<1xf32> to vector<1x1xf32>
    %cst_111 = arith.constant 0.001953125 : f32
    %227 = vector.broadcast %cst_111 : f32 to vector<1x1xf32>
    %228 = arith.mulf %226, %227 : vector<1x1xf32>
    %229 = arith.mulf %222, %222 : vector<2x256xf32>
    %cst_112 = arith.constant dense<0.000000e+00> : vector<2xf32>
    %230 = vector.multi_reduction <add>, %229, %cst_112 [1] : vector<2x256xf32> to vector<2xf32>
    %231 = vector.shape_cast %230 : vector<2xf32> to vector<2x1xf32>
    %cst_113 = arith.constant dense<0.000000e+00> : vector<1xf32>
    %232 = vector.multi_reduction <add>, %231, %cst_113 [0] : vector<2x1xf32> to vector<1xf32>
    %233 = vector.shape_cast %232 : vector<1xf32> to vector<1x1xf32>
    %cst_114 = arith.constant 0.001953125 : f32
    %234 = vector.broadcast %cst_114 : f32 to vector<1x1xf32>
    %235 = arith.mulf %233, %234 : vector<1x1xf32>
    %236 = arith.mulf %228, %228 : vector<1x1xf32>
    %237 = arith.subf %235, %236 : vector<1x1xf32>
    %cst_115 = arith.constant 0.000000e+00 : f32
    %238 = vector.broadcast %cst_115 : f32 to vector<1x1xf32>
    %239 = arith.maximumf %237, %238 : vector<1x1xf32>
    %cst_116 = arith.constant 9.99999974E-6 : f32
    %240 = vector.broadcast %cst_116 : f32 to vector<1x1xf32>
    %241 = arith.addf %239, %240 : vector<1x1xf32>
    %242 = math.rsqrt %241 : vector<1x1xf32>
    %243 = vector.broadcast %228 : vector<1x1xf32> to vector<2x256xf32>
    %244 = arith.subf %222, %243 : vector<2x256xf32>
    %245 = vector.broadcast %242 : vector<1x1xf32> to vector<2x256xf32>
    %246 = arith.mulf %244, %245 : vector<2x256xf32>
    %c6_117 = arith.constant 6 : index
    %c0_118 = arith.constant 0 : index
    %247 = vector.load %arg4[%c6_117, %c0_118] : memref<16x1xf32, #tpu.memory_space<vmem>>, vector<2x1xf32>
    %248 = vector.broadcast %247 : vector<2x1xf32> to vector<2x256xf32>
    %249 = arith.mulf %246, %248 : vector<2x256xf32>
    %c6_119 = arith.constant 6 : index
    %c0_120 = arith.constant 0 : index
    %250 = vector.load %arg5[%c6_119, %c0_120] : memref<16x1xf32, #tpu.memory_space<vmem>>, vector<2x1xf32>
    %251 = vector.broadcast %250 : vector<2x1xf32> to vector<2x256xf32>
    %252 = arith.addf %249, %251 : vector<2x256xf32>
    %c0_121 = arith.constant 0 : index
    %c6_122 = arith.constant 6 : index
    %c0_123 = arith.constant 0 : index
    %253 = vector.load %arg6[%c0_121, %c6_122, %c0_123] : memref<1x16x1xf32, #tpu.memory_space<vmem>>, vector<1x2x1xf32>
    %254 = vector.shape_cast %253 : vector<1x2x1xf32> to vector<2x1xf32>
    %cst_124 = arith.constant 1.000000e+00 : f32
    %255 = vector.broadcast %cst_124 : f32 to vector<2x1xf32>
    %256 = arith.addf %254, %255 : vector<2x1xf32>
    %257 = vector.broadcast %256 : vector<2x1xf32> to vector<2x256xf32>
    %258 = arith.mulf %252, %257 : vector<2x256xf32>
    %c0_125 = arith.constant 0 : index
    %c6_126 = arith.constant 6 : index
    %c0_127 = arith.constant 0 : index
    %259 = vector.load %arg7[%c0_125, %c6_126, %c0_127] : memref<1x16x1xf32, #tpu.memory_space<vmem>>, vector<1x2x1xf32>
    %260 = vector.shape_cast %259 : vector<1x2x1xf32> to vector<2x1xf32>
    %261 = vector.broadcast %260 : vector<2x1xf32> to vector<2x256xf32>
    %262 = arith.addf %258, %261 : vector<2x256xf32>
    %cst_128 = arith.constant 5.000000e-01 : f32
    %263 = vector.broadcast %cst_128 : f32 to vector<2x256xf32>
    %264 = arith.mulf %263, %262 : vector<2x256xf32>
    %cst_129 = arith.constant 0.707106769 : f32
    %265 = vector.broadcast %cst_129 : f32 to vector<2x256xf32>
    %266 = arith.mulf %262, %265 : vector<2x256xf32>
    %267 = math.erf %266 : vector<2x256xf32>
    %cst_130 = arith.constant 1.000000e+00 : f32
    %268 = vector.broadcast %cst_130 : f32 to vector<2x256xf32>
    %269 = arith.addf %268, %267 : vector<2x256xf32>
    %270 = arith.mulf %264, %269 : vector<2x256xf32>
    %c0_131 = arith.constant 0 : index
    %c6_132 = arith.constant 6 : index
    %c0_133 = arith.constant 0 : index
    %271 = vector.load %arg8[%c0_131, %c6_132, %c0_133] : memref<1x16x256xf32, #tpu.memory_space<vmem>>, vector<1x2x256xf32>
    %272 = vector.shape_cast %271 : vector<1x2x256xf32> to vector<2x256xf32>
    %273 = vector.shape_cast %270 : vector<2x256xf32> to vector<1x2x256xf32>
    tpu.vector_store %arg8[%c0_131, %c6_132, %c0_133], %273 {strides = array<i32>} : memref<1x16x256xf32, #tpu.memory_space<vmem>>, vector<1x2x256xf32>,
    %c8_134 = arith.constant 8 : index
    %c0_135 = arith.constant 0 : index
    %274 = vector.load %arg10[%c8_134, %c0_135] : memref<16x256xf32, #tpu.memory_space<vmem>>, vector<2x256xf32>
    %cst_136 = arith.constant dense<0.000000e+00> : vector<2xf32>
    %275 = vector.multi_reduction <add>, %274, %cst_136 [1] : vector<2x256xf32> to vector<2xf32>
    %276 = vector.shape_cast %275 : vector<2xf32> to vector<2x1xf32>
    %cst_137 = arith.constant dense<0.000000e+00> : vector<1xf32>
    %277 = vector.multi_reduction <add>, %276, %cst_137 [0] : vector<2x1xf32> to vector<1xf32>
    %278 = vector.shape_cast %277 : vector<1xf32> to vector<1x1xf32>
    %cst_138 = arith.constant 0.001953125 : f32
    %279 = vector.broadcast %cst_138 : f32 to vector<1x1xf32>
    %280 = arith.mulf %278, %279 : vector<1x1xf32>
    %281 = arith.mulf %274, %274 : vector<2x256xf32>
    %cst_139 = arith.constant dense<0.000000e+00> : vector<2xf32>
    %282 = vector.multi_reduction <add>, %281, %cst_139 [1] : vector<2x256xf32> to vector<2xf32>
    %283 = vector.shape_cast %282 : vector<2xf32> to vector<2x1xf32>
    %cst_140 = arith.constant dense<0.000000e+00> : vector<1xf32>
    %284 = vector.multi_reduction <add>, %283, %cst_140 [0] : vector<2x1xf32> to vector<1xf32>
    %285 = vector.shape_cast %284 : vector<1xf32> to vector<1x1xf32>
    %cst_141 = arith.constant 0.001953125 : f32
    %286 = vector.broadcast %cst_141 : f32 to vector<1x1xf32>
    %287 = arith.mulf %285, %286 : vector<1x1xf32>
    %288 = arith.mulf %280, %280 : vector<1x1xf32>
    %289 = arith.subf %287, %288 : vector<1x1xf32>
    %cst_142 = arith.constant 0.000000e+00 : f32
    %290 = vector.broadcast %cst_142 : f32 to vector<1x1xf32>
    %291 = arith.maximumf %289, %290 : vector<1x1xf32>
    %cst_143 = arith.constant 9.99999974E-6 : f32
    %292 = vector.broadcast %cst_143 : f32 to vector<1x1xf32>
    %293 = arith.addf %291, %292 : vector<1x1xf32>
    %294 = math.rsqrt %293 : vector<1x1xf32>
    %295 = vector.broadcast %280 : vector<1x1xf32> to vector<2x256xf32>
    %296 = arith.subf %274, %295 : vector<2x256xf32>
    %297 = vector.broadcast %294 : vector<1x1xf32> to vector<2x256xf32>
    %298 = arith.mulf %296, %297 : vector<2x256xf32>
    %c8_144 = arith.constant 8 : index
    %c0_145 = arith.constant 0 : index
    %299 = vector.load %arg4[%c8_144, %c0_145] : memref<16x1xf32, #tpu.memory_space<vmem>>, vector<2x1xf32>
    %300 = vector.broadcast %299 : vector<2x1xf32> to vector<2x256xf32>
    %301 = arith.mulf %298, %300 : vector<2x256xf32>
    %c8_146 = arith.constant 8 : index
    %c0_147 = arith.constant 0 : index
    %302 = vector.load %arg5[%c8_146, %c0_147] : memref<16x1xf32, #tpu.memory_space<vmem>>, vector<2x1xf32>
    %303 = vector.broadcast %302 : vector<2x1xf32> to vector<2x256xf32>
    %304 = arith.addf %301, %303 : vector<2x256xf32>
    %c0_148 = arith.constant 0 : index
    %c8_149 = arith.constant 8 : index
    %c0_150 = arith.constant 0 : index
    %305 = vector.load %arg6[%c0_148, %c8_149, %c0_150] : memref<1x16x1xf32, #tpu.memory_space<vmem>>, vector<1x2x1xf32>
    %306 = vector.shape_cast %305 : vector<1x2x1xf32> to vector<2x1xf32>
    %cst_151 = arith.constant 1.000000e+00 : f32
    %307 = vector.broadcast %cst_151 : f32 to vector<2x1xf32>
    %308 = arith.addf %306, %307 : vector<2x1xf32>
    %309 = vector.broadcast %308 : vector<2x1xf32> to vector<2x256xf32>
    %310 = arith.mulf %304, %309 : vector<2x256xf32>
    %c0_152 = arith.constant 0 : index
    %c8_153 = arith.constant 8 : index
    %c0_154 = arith.constant 0 : index
    %311 = vector.load %arg7[%c0_152, %c8_153, %c0_154] : memref<1x16x1xf32, #tpu.memory_space<vmem>>, vector<1x2x1xf32>
    %312 = vector.shape_cast %311 : vector<1x2x1xf32> to vector<2x1xf32>
    %313 = vector.broadcast %312 : vector<2x1xf32> to vector<2x256xf32>
    %314 = arith.addf %310, %313 : vector<2x256xf32>
    %cst_155 = arith.constant 5.000000e-01 : f32
    %315 = vector.broadcast %cst_155 : f32 to vector<2x256xf32>
    %316 = arith.mulf %315, %314 : vector<2x256xf32>
    %cst_156 = arith.constant 0.707106769 : f32
    %317 = vector.broadcast %cst_156 : f32 to vector<2x256xf32>
    %318 = arith.mulf %314, %317 : vector<2x256xf32>
    %319 = math.erf %318 : vector<2x256xf32>
    %cst_157 = arith.constant 1.000000e+00 : f32
    %320 = vector.broadcast %cst_157 : f32 to vector<2x256xf32>
    %321 = arith.addf %320, %319 : vector<2x256xf32>
    %322 = arith.mulf %316, %321 : vector<2x256xf32>
    %c0_158 = arith.constant 0 : index
    %c8_159 = arith.constant 8 : index
    %c0_160 = arith.constant 0 : index
    %323 = vector.load %arg8[%c0_158, %c8_159, %c0_160] : memref<1x16x256xf32, #tpu.memory_space<vmem>>, vector<1x2x256xf32>
    %324 = vector.shape_cast %323 : vector<1x2x256xf32> to vector<2x256xf32>
    %325 = vector.shape_cast %322 : vector<2x256xf32> to vector<1x2x256xf32>
    tpu.vector_store %arg8[%c0_158, %c8_159, %c0_160], %325 {strides = array<i32>} : memref<1x16x256xf32, #tpu.memory_space<vmem>>, vector<1x2x256xf32>,
    %c10 = arith.constant 10 : index
    %c0_161 = arith.constant 0 : index
    %326 = vector.load %arg10[%c10, %c0_161] : memref<16x256xf32, #tpu.memory_space<vmem>>, vector<2x256xf32>
    %cst_162 = arith.constant dense<0.000000e+00> : vector<2xf32>
    %327 = vector.multi_reduction <add>, %326, %cst_162 [1] : vector<2x256xf32> to vector<2xf32>
    %328 = vector.shape_cast %327 : vector<2xf32> to vector<2x1xf32>
    %cst_163 = arith.constant dense<0.000000e+00> : vector<1xf32>
    %329 = vector.multi_reduction <add>, %328, %cst_163 [0] : vector<2x1xf32> to vector<1xf32>
    %330 = vector.shape_cast %329 : vector<1xf32> to vector<1x1xf32>
    %cst_164 = arith.constant 0.001953125 : f32
    %331 = vector.broadcast %cst_164 : f32 to vector<1x1xf32>
    %332 = arith.mulf %330, %331 : vector<1x1xf32>
    %333 = arith.mulf %326, %326 : vector<2x256xf32>
    %cst_165 = arith.constant dense<0.000000e+00> : vector<2xf32>
    %334 = vector.multi_reduction <add>, %333, %cst_165 [1] : vector<2x256xf32> to vector<2xf32>
    %335 = vector.shape_cast %334 : vector<2xf32> to vector<2x1xf32>
    %cst_166 = arith.constant dense<0.000000e+00> : vector<1xf32>
    %336 = vector.multi_reduction <add>, %335, %cst_166 [0] : vector<2x1xf32> to vector<1xf32>
    %337 = vector.shape_cast %336 : vector<1xf32> to vector<1x1xf32>
    %cst_167 = arith.constant 0.001953125 : f32
    %338 = vector.broadcast %cst_167 : f32 to vector<1x1xf32>
    %339 = arith.mulf %337, %338 : vector<1x1xf32>
    %340 = arith.mulf %332, %332 : vector<1x1xf32>
    %341 = arith.subf %339, %340 : vector<1x1xf32>
    %cst_168 = arith.constant 0.000000e+00 : f32
    %342 = vector.broadcast %cst_168 : f32 to vector<1x1xf32>
    %343 = arith.maximumf %341, %342 : vector<1x1xf32>
    %cst_169 = arith.constant 9.99999974E-6 : f32
    %344 = vector.broadcast %cst_169 : f32 to vector<1x1xf32>
    %345 = arith.addf %343, %344 : vector<1x1xf32>
    %346 = math.rsqrt %345 : vector<1x1xf32>
    %347 = vector.broadcast %332 : vector<1x1xf32> to vector<2x256xf32>
    %348 = arith.subf %326, %347 : vector<2x256xf32>
    %349 = vector.broadcast %346 : vector<1x1xf32> to vector<2x256xf32>
    %350 = arith.mulf %348, %349 : vector<2x256xf32>
    %c10_170 = arith.constant 10 : index
    %c0_171 = arith.constant 0 : index
    %351 = vector.load %arg4[%c10_170, %c0_171] : memref<16x1xf32, #tpu.memory_space<vmem>>, vector<2x1xf32>
    %352 = vector.broadcast %351 : vector<2x1xf32> to vector<2x256xf32>
    %353 = arith.mulf %350, %352 : vector<2x256xf32>
    %c10_172 = arith.constant 10 : index
    %c0_173 = arith.constant 0 : index
    %354 = vector.load %arg5[%c10_172, %c0_173] : memref<16x1xf32, #tpu.memory_space<vmem>>, vector<2x1xf32>
    %355 = vector.broadcast %354 : vector<2x1xf32> to vector<2x256xf32>
    %356 = arith.addf %353, %355 : vector<2x256xf32>
    %c0_174 = arith.constant 0 : index
    %c10_175 = arith.constant 10 : index
    %c0_176 = arith.constant 0 : index
    %357 = vector.load %arg6[%c0_174, %c10_175, %c0_176] : memref<1x16x1xf32, #tpu.memory_space<vmem>>, vector<1x2x1xf32>
    %358 = vector.shape_cast %357 : vector<1x2x1xf32> to vector<2x1xf32>
    %cst_177 = arith.constant 1.000000e+00 : f32
    %359 = vector.broadcast %cst_177 : f32 to vector<2x1xf32>
    %360 = arith.addf %358, %359 : vector<2x1xf32>
    %361 = vector.broadcast %360 : vector<2x1xf32> to vector<2x256xf32>
    %362 = arith.mulf %356, %361 : vector<2x256xf32>
    %c0_178 = arith.constant 0 : index
    %c10_179 = arith.constant 10 : index
    %c0_180 = arith.constant 0 : index
    %363 = vector.load %arg7[%c0_178, %c10_179, %c0_180] : memref<1x16x1xf32, #tpu.memory_space<vmem>>, vector<1x2x1xf32>
    %364 = vector.shape_cast %363 : vector<1x2x1xf32> to vector<2x1xf32>
    %365 = vector.broadcast %364 : vector<2x1xf32> to vector<2x256xf32>
    %366 = arith.addf %362, %365 : vector<2x256xf32>
    %cst_181 = arith.constant 5.000000e-01 : f32
    %367 = vector.broadcast %cst_181 : f32 to vector<2x256xf32>
    %368 = arith.mulf %367, %366 : vector<2x256xf32>
    %cst_182 = arith.constant 0.707106769 : f32
    %369 = vector.broadcast %cst_182 : f32 to vector<2x256xf32>
    %370 = arith.mulf %366, %369 : vector<2x256xf32>
    %371 = math.erf %370 : vector<2x256xf32>
    %cst_183 = arith.constant 1.000000e+00 : f32
    %372 = vector.broadcast %cst_183 : f32 to vector<2x256xf32>
    %373 = arith.addf %372, %371 : vector<2x256xf32>
    %374 = arith.mulf %368, %373 : vector<2x256xf32>
    %c0_184 = arith.constant 0 : index
    %c10_185 = arith.constant 10 : index
    %c0_186 = arith.constant 0 : index
    %375 = vector.load %arg8[%c0_184, %c10_185, %c0_186] : memref<1x16x256xf32, #tpu.memory_space<vmem>>, vector<1x2x256xf32>
    %376 = vector.shape_cast %375 : vector<1x2x256xf32> to vector<2x256xf32>
    %377 = vector.shape_cast %374 : vector<2x256xf32> to vector<1x2x256xf32>
    tpu.vector_store %arg8[%c0_184, %c10_185, %c0_186], %377 {strides = array<i32>} : memref<1x16x256xf32, #tpu.memory_space<vmem>>, vector<1x2x256xf32>,
    %c12_187 = arith.constant 12 : index
    %c0_188 = arith.constant 0 : index
    %378 = vector.load %arg10[%c12_187, %c0_188] : memref<16x256xf32, #tpu.memory_space<vmem>>, vector<2x256xf32>
    %cst_189 = arith.constant dense<0.000000e+00> : vector<2xf32>
    %379 = vector.multi_reduction <add>, %378, %cst_189 [1] : vector<2x256xf32> to vector<2xf32>
    %380 = vector.shape_cast %379 : vector<2xf32> to vector<2x1xf32>
    %cst_190 = arith.constant dense<0.000000e+00> : vector<1xf32>
    %381 = vector.multi_reduction <add>, %380, %cst_190 [0] : vector<2x1xf32> to vector<1xf32>
    %382 = vector.shape_cast %381 : vector<1xf32> to vector<1x1xf32>
    %cst_191 = arith.constant 0.001953125 : f32
    %383 = vector.broadcast %cst_191 : f32 to vector<1x1xf32>
    %384 = arith.mulf %382, %383 : vector<1x1xf32>
    %385 = arith.mulf %378, %378 : vector<2x256xf32>
    %cst_192 = arith.constant dense<0.000000e+00> : vector<2xf32>
    %386 = vector.multi_reduction <add>, %385, %cst_192 [1] : vector<2x256xf32> to vector<2xf32>
    %387 = vector.shape_cast %386 : vector<2xf32> to vector<2x1xf32>
    %cst_193 = arith.constant dense<0.000000e+00> : vector<1xf32>
    %388 = vector.multi_reduction <add>, %387, %cst_193 [0] : vector<2x1xf32> to vector<1xf32>
    %389 = vector.shape_cast %388 : vector<1xf32> to vector<1x1xf32>
    %cst_194 = arith.constant 0.001953125 : f32
    %390 = vector.broadcast %cst_194 : f32 to vector<1x1xf32>
    %391 = arith.mulf %389, %390 : vector<1x1xf32>
    %392 = arith.mulf %384, %384 : vector<1x1xf32>
    %393 = arith.subf %391, %392 : vector<1x1xf32>
    %cst_195 = arith.constant 0.000000e+00 : f32
    %394 = vector.broadcast %cst_195 : f32 to vector<1x1xf32>
    %395 = arith.maximumf %393, %394 : vector<1x1xf32>
    %cst_196 = arith.constant 9.99999974E-6 : f32
    %396 = vector.broadcast %cst_196 : f32 to vector<1x1xf32>
    %397 = arith.addf %395, %396 : vector<1x1xf32>
    %398 = math.rsqrt %397 : vector<1x1xf32>
    %399 = vector.broadcast %384 : vector<1x1xf32> to vector<2x256xf32>
    %400 = arith.subf %378, %399 : vector<2x256xf32>
    %401 = vector.broadcast %398 : vector<1x1xf32> to vector<2x256xf32>
    %402 = arith.mulf %400, %401 : vector<2x256xf32>
    %c12_197 = arith.constant 12 : index
    %c0_198 = arith.constant 0 : index
    %403 = vector.load %arg4[%c12_197, %c0_198] : memref<16x1xf32, #tpu.memory_space<vmem>>, vector<2x1xf32>
    %404 = vector.broadcast %403 : vector<2x1xf32> to vector<2x256xf32>
    %405 = arith.mulf %402, %404 : vector<2x256xf32>
    %c12_199 = arith.constant 12 : index
    %c0_200 = arith.constant 0 : index
    %406 = vector.load %arg5[%c12_199, %c0_200] : memref<16x1xf32, #tpu.memory_space<vmem>>, vector<2x1xf32>
    %407 = vector.broadcast %406 : vector<2x1xf32> to vector<2x256xf32>
    %408 = arith.addf %405, %407 : vector<2x256xf32>
    %c0_201 = arith.constant 0 : index
    %c12_202 = arith.constant 12 : index
    %c0_203 = arith.constant 0 : index
    %409 = vector.load %arg6[%c0_201, %c12_202, %c0_203] : memref<1x16x1xf32, #tpu.memory_space<vmem>>, vector<1x2x1xf32>
    %410 = vector.shape_cast %409 : vector<1x2x1xf32> to vector<2x1xf32>
    %cst_204 = arith.constant 1.000000e+00 : f32
    %411 = vector.broadcast %cst_204 : f32 to vector<2x1xf32>
    %412 = arith.addf %410, %411 : vector<2x1xf32>
    %413 = vector.broadcast %412 : vector<2x1xf32> to vector<2x256xf32>
    %414 = arith.mulf %408, %413 : vector<2x256xf32>
    %c0_205 = arith.constant 0 : index
    %c12_206 = arith.constant 12 : index
    %c0_207 = arith.constant 0 : index
    %415 = vector.load %arg7[%c0_205, %c12_206, %c0_207] : memref<1x16x1xf32, #tpu.memory_space<vmem>>, vector<1x2x1xf32>
    %416 = vector.shape_cast %415 : vector<1x2x1xf32> to vector<2x1xf32>
    %417 = vector.broadcast %416 : vector<2x1xf32> to vector<2x256xf32>
    %418 = arith.addf %414, %417 : vector<2x256xf32>
    %cst_208 = arith.constant 5.000000e-01 : f32
    %419 = vector.broadcast %cst_208 : f32 to vector<2x256xf32>
    %420 = arith.mulf %419, %418 : vector<2x256xf32>
    %cst_209 = arith.constant 0.707106769 : f32
    %421 = vector.broadcast %cst_209 : f32 to vector<2x256xf32>
    %422 = arith.mulf %418, %421 : vector<2x256xf32>
    %423 = math.erf %422 : vector<2x256xf32>
    %cst_210 = arith.constant 1.000000e+00 : f32
    %424 = vector.broadcast %cst_210 : f32 to vector<2x256xf32>
    %425 = arith.addf %424, %423 : vector<2x256xf32>
    %426 = arith.mulf %420, %425 : vector<2x256xf32>
    %c0_211 = arith.constant 0 : index
    %c12_212 = arith.constant 12 : index
    %c0_213 = arith.constant 0 : index
    %427 = vector.load %arg8[%c0_211, %c12_212, %c0_213] : memref<1x16x256xf32, #tpu.memory_space<vmem>>, vector<1x2x256xf32>
    %428 = vector.shape_cast %427 : vector<1x2x256xf32> to vector<2x256xf32>
    %429 = vector.shape_cast %426 : vector<2x256xf32> to vector<1x2x256xf32>
    tpu.vector_store %arg8[%c0_211, %c12_212, %c0_213], %429 {strides = array<i32>} : memref<1x16x256xf32, #tpu.memory_space<vmem>>, vector<1x2x256xf32>,
    %c14 = arith.constant 14 : index
    %c0_214 = arith.constant 0 : index
    %430 = vector.load %arg10[%c14, %c0_214] : memref<16x256xf32, #tpu.memory_space<vmem>>, vector<2x256xf32>
    %cst_215 = arith.constant dense<0.000000e+00> : vector<2xf32>
    %431 = vector.multi_reduction <add>, %430, %cst_215 [1] : vector<2x256xf32> to vector<2xf32>
    %432 = vector.shape_cast %431 : vector<2xf32> to vector<2x1xf32>
    %cst_216 = arith.constant dense<0.000000e+00> : vector<1xf32>
    %433 = vector.multi_reduction <add>, %432, %cst_216 [0] : vector<2x1xf32> to vector<1xf32>
    %434 = vector.shape_cast %433 : vector<1xf32> to vector<1x1xf32>
    %cst_217 = arith.constant 0.001953125 : f32
    %435 = vector.broadcast %cst_217 : f32 to vector<1x1xf32>
    %436 = arith.mulf %434, %435 : vector<1x1xf32>
    %437 = arith.mulf %430, %430 : vector<2x256xf32>
    %cst_218 = arith.constant dense<0.000000e+00> : vector<2xf32>
    %438 = vector.multi_reduction <add>, %437, %cst_218 [1] : vector<2x256xf32> to vector<2xf32>
    %439 = vector.shape_cast %438 : vector<2xf32> to vector<2x1xf32>
    %cst_219 = arith.constant dense<0.000000e+00> : vector<1xf32>
    %440 = vector.multi_reduction <add>, %439, %cst_219 [0] : vector<2x1xf32> to vector<1xf32>
    %441 = vector.shape_cast %440 : vector<1xf32> to vector<1x1xf32>
    %cst_220 = arith.constant 0.001953125 : f32
    %442 = vector.broadcast %cst_220 : f32 to vector<1x1xf32>
    %443 = arith.mulf %441, %442 : vector<1x1xf32>
    %444 = arith.mulf %436, %436 : vector<1x1xf32>
    %445 = arith.subf %443, %444 : vector<1x1xf32>
    %cst_221 = arith.constant 0.000000e+00 : f32
    %446 = vector.broadcast %cst_221 : f32 to vector<1x1xf32>
    %447 = arith.maximumf %445, %446 : vector<1x1xf32>
    %cst_222 = arith.constant 9.99999974E-6 : f32
    %448 = vector.broadcast %cst_222 : f32 to vector<1x1xf32>
    %449 = arith.addf %447, %448 : vector<1x1xf32>
    %450 = math.rsqrt %449 : vector<1x1xf32>
    %451 = vector.broadcast %436 : vector<1x1xf32> to vector<2x256xf32>
    %452 = arith.subf %430, %451 : vector<2x256xf32>
    %453 = vector.broadcast %450 : vector<1x1xf32> to vector<2x256xf32>
    %454 = arith.mulf %452, %453 : vector<2x256xf32>
    %c14_223 = arith.constant 14 : index
    %c0_224 = arith.constant 0 : index
    %455 = vector.load %arg4[%c14_223, %c0_224] : memref<16x1xf32, #tpu.memory_space<vmem>>, vector<2x1xf32>
    %456 = vector.broadcast %455 : vector<2x1xf32> to vector<2x256xf32>
    %457 = arith.mulf %454, %456 : vector<2x256xf32>
    %c14_225 = arith.constant 14 : index
    %c0_226 = arith.constant 0 : index
    %458 = vector.load %arg5[%c14_225, %c0_226] : memref<16x1xf32, #tpu.memory_space<vmem>>, vector<2x1xf32>
    %459 = vector.broadcast %458 : vector<2x1xf32> to vector<2x256xf32>
    %460 = arith.addf %457, %459 : vector<2x256xf32>
    %c0_227 = arith.constant 0 : index
    %c14_228 = arith.constant 14 : index
    %c0_229 = arith.constant 0 : index
    %461 = vector.load %arg6[%c0_227, %c14_228, %c0_229] : memref<1x16x1xf32, #tpu.memory_space<vmem>>, vector<1x2x1xf32>
    %462 = vector.shape_cast %461 : vector<1x2x1xf32> to vector<2x1xf32>
    %cst_230 = arith.constant 1.000000e+00 : f32
    %463 = vector.broadcast %cst_230 : f32 to vector<2x1xf32>
    %464 = arith.addf %462, %463 : vector<2x1xf32>
    %465 = vector.broadcast %464 : vector<2x1xf32> to vector<2x256xf32>
    %466 = arith.mulf %460, %465 : vector<2x256xf32>
    %c0_231 = arith.constant 0 : index
    %c14_232 = arith.constant 14 : index
    %c0_233 = arith.constant 0 : index
    %467 = vector.load %arg7[%c0_231, %c14_232, %c0_233] : memref<1x16x1xf32, #tpu.memory_space<vmem>>, vector<1x2x1xf32>
    %468 = vector.shape_cast %467 : vector<1x2x1xf32> to vector<2x1xf32>
    %469 = vector.broadcast %468 : vector<2x1xf32> to vector<2x256xf32>
    %470 = arith.addf %466, %469 : vector<2x256xf32>
    %cst_234 = arith.constant 5.000000e-01 : f32
    %471 = vector.broadcast %cst_234 : f32 to vector<2x256xf32>
    %472 = arith.mulf %471, %470 : vector<2x256xf32>
    %cst_235 = arith.constant 0.707106769 : f32
    %473 = vector.broadcast %cst_235 : f32 to vector<2x256xf32>
    %474 = arith.mulf %470, %473 : vector<2x256xf32>
    %475 = math.erf %474 : vector<2x256xf32>
    %cst_236 = arith.constant 1.000000e+00 : f32
    %476 = vector.broadcast %cst_236 : f32 to vector<2x256xf32>
    %477 = arith.addf %476, %475 : vector<2x256xf32>
    %478 = arith.mulf %472, %477 : vector<2x256xf32>
    %c0_237 = arith.constant 0 : index
    %c14_238 = arith.constant 14 : index
    %c0_239 = arith.constant 0 : index
    %479 = vector.load %arg8[%c0_237, %c14_238, %c0_239] : memref<1x16x256xf32, #tpu.memory_space<vmem>>, vector<1x2x256xf32>
    %480 = vector.shape_cast %479 : vector<1x2x256xf32> to vector<2x256xf32>
    %481 = vector.shape_cast %478 : vector<2x256xf32> to vector<1x2x256xf32>
    tpu.vector_store %arg8[%c0_237, %c14_238, %c0_239], %481 {strides = array<i32>} : memref<1x16x256xf32, #tpu.memory_space<vmem>>, vector<1x2x256xf32>,
    return
  }
  func.func @transform_0(%arg0: i32) -> (i32, i32, i32) {
    %c0_i32 = arith.constant 0 : i32
    %c0_i32_0 = arith.constant 0 : i32
    %c0_i32_1 = arith.constant 0 : i32
    return %arg0, %c0_i32, %c0_i32_0 : i32, i32, i32
  }
  func.func @transform_1(%arg0: i32) -> (i32, i32) {
    %c0_i32 = arith.constant 0 : i32
    %c0_i32_0 = arith.constant 0 : i32
    %c0_i32_1 = arith.constant 0 : i32
    return %c0_i32, %c0_i32_0 : i32, i32
  }
  func.func @transform_2(%arg0: i32) -> (i32, i32) {
    %c0_i32 = arith.constant 0 : i32
    %c0_i32_0 = arith.constant 0 : i32
    %c0_i32_1 = arith.constant 0 : i32
    return %c0_i32, %c0_i32_0 : i32, i32
  }
  func.func @transform_3(%arg0: i32) -> (i32, i32) {
    %c0_i32 = arith.constant 0 : i32
    %c0_i32_0 = arith.constant 0 : i32
    %c0_i32_1 = arith.constant 0 : i32
    return %c0_i32, %c0_i32_0 : i32, i32
  }
  func.func @transform_4(%arg0: i32) -> (i32, i32) {
    %c0_i32 = arith.constant 0 : i32
    %c0_i32_0 = arith.constant 0 : i32
    %c0_i32_1 = arith.constant 0 : i32
    return %c0_i32, %c0_i32_0 : i32, i32
  }
  func.func @transform_5(%arg0: i32) -> (i32, i32, i32) {
    %c0_i32 = arith.constant 0 : i32
    %c0_i32_0 = arith.constant 0 : i32
    %c0_i32_1 = arith.constant 0 : i32
    return %arg0, %c0_i32, %c0_i32_0 : i32, i32, i32
  }
  func.func @transform_6(%arg0: i32) -> (i32, i32, i32) {
    %c0_i32 = arith.constant 0 : i32
    %c0_i32_0 = arith.constant 0 : i32
    %c0_i32_1 = arith.constant 0 : i32
    return %arg0, %c0_i32, %c0_i32_0 : i32, i32, i32
  }
  func.func @transform_7(%arg0: i32) -> (i32, i32, i32) {
    %c0_i32 = arith.constant 0 : i32
    %c0_i32_0 = arith.constant 0 : i32
    %c0_i32_1 = arith.constant 0 : i32
    return %arg0, %c0_i32, %c0_i32_0 : i32, i32, i32
  }
}

</mosaic_0001>

<llo_original>
// kernel: tpu_custom_call.1
$region0: #{tpu_custom_call.1}
  #allocation0 [shape = 'u32[]', space=smem, size = 0x4, offset = 0x4, fixed_abs, tag = 'smem constant byte address 0x4 - core index']
  #allocation1 [shape = 'u32[72,128]{1,0:T(1,128)}', space=vmem, size = 0x9000, scoped, tag = 'internal scratch']
  #allocation2 [shape = 'f32[36,256]{1,0:T(8,128)}', space=vmem, size = 0xa000, scoped, tag = 'scratch operand']
  #allocation3 [shape = 'f32[16,256]{1,0:T(8,128)}', space=vmem, size = 0x4000, scoped, tag = 'scratch operand']
  %s0 = inlined_call_operand.vmem [shape: f32[2,4,290], index: 0, kind: input, shape index: {}]
  %s1 = inlined_call_operand.vmem [shape: f32[16,36], index: 1, kind: input, shape index: {}]
  %s2 = inlined_call_operand.vmem [shape: f32[16,1], index: 2, kind: input, shape index: {}]
  %s3 = inlined_call_operand.vmem [shape: f32[16,1], index: 3, kind: input, shape index: {}]
  %s4 = inlined_call_operand.vmem [shape: f32[16,1], index: 4, kind: input, shape index: {}]
  %s5 = inlined_call_operand.vmem [shape: f32[2,16,1], index: 5, kind: input, shape index: {}]
  %s6 = inlined_call_operand.vmem [shape: f32[2,16,1], index: 6, kind: input, shape index: {}]
  %s7 = inlined_call_operand.hbm [shape: f32[2,16,256], index: 7, kind: output, shape index: {}]
  %s8 = sld [smem:[#allocation0]]
  $region61: #{tpu_custom_call.1} parent=0
    _
  %s10 = ssub.s32 1, %s8
  %s11 = scalar_select 0, %s10, %s8
  $region1: #{tpu_custom_call.1} parent=0
    #allocation4 [shape = 'u8[32768]{0}', space=vmem, size = 0x8000, scoped, tag = 'output window, operand 0']
    #allocation5 [shape = 's32[2]{0}', space=sflag, size = 0x8, scoped, tag = 'scoped memory for tpu_custom_call.1']
    %12 = vsyncpa [#allocation5], 0
    %s13 = scalar_lea.sflag [#allocation5], 1
    %14 = vsyncpa %s13, 0
    loop: start=0, step=1, limit=4
    $region2: #{tpu_custom_call.1} parent=1 // loop_pre_header
      _
    $region3: #{tpu_custom_call.1} parent=1 // loop_header
      %s16 = sphi 0, %s20
      %p17 = scmp.ge.s32.totalorder %s16, 4
      %s26 = sphi 0, %s28
      %s29 = sphi 0, %s26
      %s30 = sphi 0, %s29
      %s46 = sphi 0, %s30
      %s50 = sphi 0, %s50
      %s52 = sphi 0, %s50
      %s53 = sphi 0, %s52
      %s67 = sphi 0, %s53
      %s71 = sphi 0, %s71
      %s73 = sphi 0, %s71
      %s74 = sphi 0, %s73
      %s88 = sphi 0, %s74
      %s92 = sphi 0, %s92
      %s94 = sphi 0, %s92
      %s95 = sphi 0, %s94
      %s109 = sphi 0, %s95
      %s113 = sphi 0, %s113
      %s115 = sphi 0, %s113
      %s116 = sphi 0, %s115
      %s130 = sphi 0, %s116
      %s136 = sphi 0, %s138
      %s139 = sphi 0, %s136
      %s140 = sphi 0, %s139
      %s156 = sphi 0, %s140
      %s162 = sphi 0, %s164
      %s165 = sphi 0, %s162
      %s166 = sphi 0, %s165
      %s182 = sphi 0, %s166
      %s188 = sphi 0, %s190
      %s191 = sphi 0, %s188
      %s192 = sphi 0, %s191
      %s208 = sphi 0, %s192
    $region4: #{tpu_custom_call.1} parent=1 // loop_header_branch
      %19 = sbr.rel (%p17) target = $region8
    $region5: #{tpu_custom_call.1} parent=1 // loop_body
      %s21 = ssub.s32 %s16, 1
      %s22 = ssub.s32 %s16, 2
      %s23 = sadd.s32 %s16, 1
      %s24 = ssub.s32 %s16, %s23
      %p25 = scmp.eq.s32.totalorder %s24, 0
      %s27 = sadd.s32 %s26, 1
      %s28 = scalar_select %p25, %s26, %s27
      %p31 = pneg %p25
      %p32 = scmp.eq.s32.totalorder %s16, 1
      %p33 = por %p31, %p32
      %p34 = scmp.ne.s32.totalorder %s26, %s29
      %p35 = scmp.eq.s32.totalorder %s16, 0
      %p36 = por %p34, %p35
      %p37 = scmp.ne.s32.totalorder %s26, %s29
      %p38 = scmp.eq.s32.totalorder %s21, 1
      %p39 = por %p37, %p38
      %p40 = scmp.ne.s32.totalorder %s29, %s30
      %p41 = scmp.eq.s32.totalorder %s21, 0
      %p42 = por %p40, %p41
      %p43 = scmp.ne.s32.totalorder %s29, %s30
      %p44 = scmp.eq.s32.totalorder %s22, 1
      %p45 = por %p43, %p44
      %p47 = scmp.ne.s32.totalorder %s30, %s46
      %p48 = scmp.eq.s32.totalorder %s22, 0
      %p49 = por %p47, %p48
      %s51 = sadd.s32 %s50, 1
      %p54 = scmp.eq.s32.totalorder %s16, 1
      %p55 = scmp.ne.s32.totalorder %s50, %s52
      %p56 = scmp.eq.s32.totalorder %s16, 0
      %p57 = por %p55, %p56
      %p58 = scmp.ne.s32.totalorder %s50, %s52
      %p59 = scmp.eq.s32.totalorder %s21, 1
      %p60 = por %p58, %p59
      %p61 = scmp.ne.s32.totalorder %s52, %s53
      %p62 = scmp.eq.s32.totalorder %s21, 0
      %p63 = por %p61, %p62
      %p64 = scmp.ne.s32.totalorder %s52, %s53
      %p65 = scmp.eq.s32.totalorder %s22, 1
      %p66 = por %p64, %p65
      %p68 = scmp.ne.s32.totalorder %s53, %s67
      %p69 = scmp.eq.s32.totalorder %s22, 0
      %p70 = por %p68, %p69
      %s72 = sadd.s32 %s71, 1
      %p75 = scmp.eq.s32.totalorder %s16, 1
      %p76 = scmp.ne.s32.totalorder %s71, %s73
      %p77 = scmp.eq.s32.totalorder %s16, 0
      %p78 = por %p76, %p77
      %p79 = scmp.ne.s32.totalorder %s71, %s73
      %p80 = scmp.eq.s32.totalorder %s21, 1
      %p81 = por %p79, %p80
      %p82 = scmp.ne.s32.totalorder %s73, %s74
      %p83 = scmp.eq.s32.totalorder %s21, 0
      %p84 = por %p82, %p83
      %p85 = scmp.ne.s32.totalorder %s73, %s74
      %p86 = scmp.eq.s32.totalorder %s22, 1
      %p87 = por %p85, %p86
      %p89 = scmp.ne.s32.totalorder %s74, %s88
      %p90 = scmp.eq.s32.totalorder %s22, 0
      %p91 = por %p89, %p90
      %s93 = sadd.s32 %s92, 1
      %p96 = scmp.eq.s32.totalorder %s16, 1
      %p97 = scmp.ne.s32.totalorder %s92, %s94
      %p98 = scmp.eq.s32.totalorder %s16, 0
      %p99 = por %p97, %p98
      %p100 = scmp.ne.s32.totalorder %s92, %s94
      %p101 = scmp.eq.s32.totalorder %s21, 1
      %p102 = por %p100, %p101
      %p103 = scmp.ne.s32.totalorder %s94, %s95
      %p104 = scmp.eq.s32.totalorder %s21, 0
      %p105 = por %p103, %p104
      %p106 = scmp.ne.s32.totalorder %s94, %s95
      %p107 = scmp.eq.s32.totalorder %s22, 1
      %p108 = por %p106, %p107
      %p110 = scmp.ne.s32.totalorder %s95, %s109
      %p111 = scmp.eq.s32.totalorder %s22, 0
      %p112 = por %p110, %p111
      %s114 = sadd.s32 %s113, 1
      %p117 = scmp.eq.s32.totalorder %s16, 1
      %p118 = scmp.ne.s32.totalorder %s113, %s115
      %p119 = scmp.eq.s32.totalorder %s16, 0
      %p120 = por %p118, %p119
      %p121 = scmp.ne.s32.totalorder %s113, %s115
      %p122 = scmp.eq.s32.totalorder %s21, 1
      %p123 = por %p121, %p122
      %p124 = scmp.ne.s32.totalorder %s115, %s116
      %p125 = scmp.eq.s32.totalorder %s21, 0
      %p126 = por %p124, %p125
      %p127 = scmp.ne.s32.totalorder %s115, %s116
      %p128 = scmp.eq.s32.totalorder %s22, 1
      %p129 = por %p127, %p128
      %p131 = scmp.ne.s32.totalorder %s116, %s130
      %p132 = scmp.eq.s32.totalorder %s22, 0
      %p133 = por %p131, %p132
      %s134 = ssub.s32 %s16, %s23
      %p135 = scmp.eq.s32.totalorder %s134, 0
      %s137 = sadd.s32 %s136, 1
      %s138 = scalar_select %p135, %s136, %s137
      %p141 = pneg %p135
      %p142 = scmp.eq.s32.totalorder %s16, 1
      %p143 = por %p141, %p142
      %p144 = scmp.ne.s32.totalorder %s136, %s139
      %p145 = scmp.eq.s32.totalorder %s16, 0
      %p146 = por %p144, %p145
      %p147 = scmp.ne.s32.totalorder %s136, %s139
      %p148 = scmp.eq.s32.totalorder %s21, 1
      %p149 = por %p147, %p148
      %p150 = scmp.ne.s32.totalorder %s139, %s140
      %p151 = scmp.eq.s32.totalorder %s21, 0
      %p152 = por %p150, %p151
      %p153 = scmp.ne.s32.totalorder %s139, %s140
      %p154 = scmp.eq.s32.totalorder %s22, 1
      %p155 = por %p153, %p154
      %p157 = scmp.ne.s32.totalorder %s140, %s156
      %p158 = scmp.eq.s32.totalorder %s22, 0
      %p159 = por %p157, %p158
      %s160 = ssub.s32 %s16, %s23
      %p161 = scmp.eq.s32.totalorder %s160, 0
      %s163 = sadd.s32 %s162, 1
      %s164 = scalar_select %p161, %s162, %s163
      %p167 = pneg %p161
      %p168 = scmp.eq.s32.totalorder %s16, 1
      %p169 = por %p167, %p168
      %p170 = scmp.ne.s32.totalorder %s162, %s165
      %p171 = scmp.eq.s32.totalorder %s16, 0
      %p172 = por %p170, %p171
      %p173 = scmp.ne.s32.totalorder %s162, %s165
      %p174 = scmp.eq.s32.totalorder %s21, 1
      %p175 = por %p173, %p174
      %p176 = scmp.ne.s32.totalorder %s165, %s166
      %p177 = scmp.eq.s32.totalorder %s21, 0
      %p178 = por %p176, %p177
      %p179 = scmp.ne.s32.totalorder %s165, %s166
      %p180 = scmp.eq.s32.totalorder %s22, 1
      %p181 = por %p179, %p180
      %p183 = scmp.ne.s32.totalorder %s166, %s182
      %p184 = scmp.eq.s32.totalorder %s22, 0
      %p185 = por %p183, %p184
      %s186 = ssub.s32 %s16, %s23
      %p187 = scmp.eq.s32.totalorder %s186, 0
      %s189 = sadd.s32 %s188, 1
      %s190 = scalar_select %p187, %s188, %s189
      %p193 = pneg %p187
      %p194 = scmp.eq.s32.totalorder %s16, 1
      %p195 = por %p193, %p194
      %p196 = scmp.ne.s32.totalorder %s188, %s191
      %p197 = scmp.eq.s32.totalorder %s16, 0
      %p198 = por %p196, %p197
      %p199 = scmp.ne.s32.totalorder %s188, %s191
      %p200 = scmp.eq.s32.totalorder %s21, 1
      %p201 = por %p199, %p200
      %p202 = scmp.ne.s32.totalorder %s191, %s192
      %p203 = scmp.eq.s32.totalorder %s21, 0
      %p204 = por %p202, %p203
      %p205 = scmp.ne.s32.totalorder %s191, %s192
      %p206 = scmp.eq.s32.totalorder %s22, 1
      %p207 = por %p205, %p206
      %p209 = scmp.ne.s32.totalorder %s192, %s208
      %p210 = scmp.eq.s32.totalorder %s22, 0
      %p211 = por %p209, %p210
      %p212 = scmp.le.s32.totalorder 1, %s16
      %p213 = scmp.lt.s32.totalorder %s16, 3
      %p214 = pnand %p212, %p213
      %p215 = pneg %p214
      // Predicated region
      $region9: #{tpu_custom_call.1} parent=5 // pred_check
        _
      $region10: #{tpu_custom_call.1} parent=5 // pred_check_branch
        %217 = sbr.rel (%p214) target = $region12
      $region11: #{tpu_custom_call.1} parent=5 // pred_region
        %s218 = ssub.s32 %s16, 1
        // Predicated region
        $region13: #{tpu_custom_call.1} parent=11 // pred_check
          %p219 = pneg %p63
        $region14: #{tpu_custom_call.1} parent=11 // pred_check_branch
          %221 = sbr.rel (%p219) target = $region16
        $region15: #{tpu_custom_call.1} parent=11 // pred_region
          _
        $region16: #{tpu_custom_call.1} parent=11 // pred_fallthru
          _
        // Predicated region
        $region17: #{tpu_custom_call.1} parent=11 // pred_check
          %p222 = pneg %p84
        $region18: #{tpu_custom_call.1} parent=11 // pred_check_branch
          %224 = sbr.rel (%p222) target = $region20
        $region19: #{tpu_custom_call.1} parent=11 // pred_region
          _
        $region20: #{tpu_custom_call.1} parent=11 // pred_fallthru
          _
        // Predicated region
        $region21: #{tpu_custom_call.1} parent=11 // pred_check
          %p225 = pneg %p105
        $region22: #{tpu_custom_call.1} parent=11 // pred_check_branch
          %227 = sbr.rel (%p225) target = $region24
        $region23: #{tpu_custom_call.1} parent=11 // pred_region
          _
        $region24: #{tpu_custom_call.1} parent=11 // pred_fallthru
          _
        // Predicated region
        $region25: #{tpu_custom_call.1} parent=11 // pred_check
          %p228 = pneg %p126
        $region26: #{tpu_custom_call.1} parent=11 // pred_check_branch
          %230 = sbr.rel (%p228) target = $region28
        $region27: #{tpu_custom_call.1} parent=11 // pred_region
          _
        $region28: #{tpu_custom_call.1} parent=11 // pred_fallthru
          _
      $region12: #{tpu_custom_call.1} parent=5 // pred_fallthru
        _
      %p231 = scmp.lt.s32.totalorder %s16, 2
      // Predicated region
      $region29: #{tpu_custom_call.1} parent=5 // pred_check
        %p232 = pneg %p231
      $region30: #{tpu_custom_call.1} parent=5 // pred_check_branch
        %234 = sbr.rel (%p232) target = $region32
      $region31: #{tpu_custom_call.1} parent=5 // pred_region
        // Predicated region
        $region33: #{tpu_custom_call.1} parent=31 // pred_check
          %p235 = pneg %p36
        $region34: #{tpu_custom_call.1} parent=31 // pred_check_branch
          %237 = sbr.rel (%p235) target = $region36
        $region35: #{tpu_custom_call.1} parent=31 // pred_region
          %p238 = scmp.lt.s32.totalorder %s16, 1
          %s239 = scalar_select %p238, %s16, 1
          %s240 = smul.addr %s239, 3
          %s241 = smul.addr %s240, 4
          %s242 = scalar_lea.vmem %s0, %s241
        $region36: #{tpu_custom_call.1} parent=31 // pred_fallthru
          _
        // Predicated region
        $region37: #{tpu_custom_call.1} parent=31 // pred_check
          %p243 = pneg %p146
        $region38: #{tpu_custom_call.1} parent=31 // pred_check_branch
          %245 = sbr.rel (%p243) target = $region40
        $region39: #{tpu_custom_call.1} parent=31 // pred_region
          %p246 = scmp.lt.s32.totalorder %s16, 1
          %s247 = scalar_select %p246, %s16, 1
          %s248 = smul.addr %s247, 2
          %s249 = smul.addr %s248, 8
          %s250 = scalar_lea.vmem %s5, %s249
        $region40: #{tpu_custom_call.1} parent=31 // pred_fallthru
          _
        // Predicated region
        $region41: #{tpu_custom_call.1} parent=31 // pred_check
          %p251 = pneg %p172
        $region42: #{tpu_custom_call.1} parent=31 // pred_check_branch
          %253 = sbr.rel (%p251) target = $region44
        $region43: #{tpu_custom_call.1} parent=31 // pred_region
          %p254 = scmp.lt.s32.totalorder %s16, 1
          %s255 = scalar_select %p254, %s16, 1
          %s256 = smul.addr %s255, 2
          %s257 = smul.addr %s256, 8
          %s258 = scalar_lea.vmem %s6, %s257
        $region44: #{tpu_custom_call.1} parent=31 // pred_fallthru
          _
      $region32: #{tpu_custom_call.1} parent=5 // pred_fallthru
        _
      %p259 = scmp.le.s32.totalorder 1, %s16
      %p260 = scmp.lt.s32.totalorder %s16, 3
      %p261 = pnand %p259, %p260
      %p262 = pneg %p261
      // Predicated region
      $region45: #{tpu_custom_call.1} parent=5 // pred_check
        _
      $region46: #{tpu_custom_call.1} parent=5 // pred_check_branch
        %264 = sbr.rel (%p261) target = $region48
      $region47: #{tpu_custom_call.1} parent=5 // pred_region
        %s265 = ssub.s32 %s16, 1
        %p266 = scmp.lt.s32.totalorder %s21, 1
        %s267 = scalar_select %p266, %s21, 1
        %s268 = smul.addr %s267, 3
        %s269 = smul.addr %s268, 4
        %s270 = scalar_lea.vmem %s0, %s269
        %p271 = pneg %p42
        %p272 = pneg %p39
        %p273 = pneg %p63
        %p274 = pneg %p60
        %p275 = pneg %p84
        %p276 = pneg %p81
        %p277 = pneg %p105
        %p278 = pneg %p102
        %p279 = pneg %p126
        %p280 = pneg %p123
        %p281 = scmp.lt.s32.totalorder %s21, 1
        %s282 = scalar_select %p281, %s21, 1
        %s283 = smul.addr %s282, 2
        %s284 = smul.addr %s283, 8
        %s285 = scalar_lea.vmem %s5, %s284
        %p286 = pneg %p152
        %p287 = pneg %p149
        %p288 = scmp.lt.s32.totalorder %s21, 1
        %s289 = scalar_select %p288, %s21, 1
        %s290 = smul.addr %s289, 2
        %s291 = smul.addr %s290, 8
        %s292 = scalar_lea.vmem %s6, %s291
        %p293 = pneg %p178
        %p294 = pneg %p175
        %p295 = pneg %p204
        %p296 = pneg %p201
        %s297 = sand.u32 %s191, 1
        %s298 = scalar_lea.sflag [#allocation5], %s297
        %s299 = sand.u32 %s191, 1
        %s300 = smul.addr %s299, 32
        %s301 = scalar_lea.vmem [#allocation4], %s300
        %p302 = scmp.lt.s32.totalorder %s21, 1
        %s303 = scalar_select %p302, %s21, 1
        %s304 = smul.addr %s303, 3
        %s305 = smul.addr %s304, 4
        %s306 = scalar_lea.vmem %s0, %s305
        %p307 = scmp.lt.s32.totalorder %s21, 1
        %s308 = scalar_select %p307, %s21, 1
        %s309 = smul.addr %s308, 2
        %s310 = smul.addr %s309, 8
        %s311 = scalar_lea.vmem %s5, %s310
        %p312 = scmp.lt.s32.totalorder %s21, 1
        %s313 = scalar_select %p312, %s21, 1
        %s314 = smul.addr %s313, 2
        %s315 = smul.addr %s314, 8
        %s316 = scalar_lea.vmem %s6, %s315
        %v317 = vld [vmem:[%s306] sm:$0xff]
        %v318 = vld [vmem:[%s306 + $0x8] sm:$0xf]
        %v319 = vlaneseq
        %v320 = vand.u32 %v319, 127
        %v321 = vadd.s32 %v320, 128
        %vm322 = vcmp.lt.s32.totalorder %v320, 0
        %v323 = vsub.s32 0, %v320
        %v324 = vsel %vm322, %v323, %v320
        %v325 = vshrl.u32 %v324, 4
        %v326 = vand.u32 %v324, 15
        %v327 = vsub.s32 0, %v326
        %v328 = vsel %vm322, %v327, %v326
        %vm329 = vcmp.lt.s32.totalorder %v321, 0
        %v330 = vsub.s32 0, %v321
        %v331 = vsel %vm329, %v330, %v321
        %v332 = vshrl.u32 %v331, 4
        %v333 = vand.u32 %v331, 15
        %v334 = vsub.s32 0, %v333
        %v335 = vsel %vm329, %v334, %v333
        %vm336 = vcmp.ne.s32.totalorder %v328, 0
        %vm337 = vcmp.ne.s32.totalorder %v335, 0
        %vm338 = vcmp.lt.s32.totalorder %v328, 0
        %vm339 = vcmp.lt.s32.totalorder %v335, 0
        %vm340 = vmand %vm338, %vm336
        %vm341 = vmand %vm339, %vm337
        %v342 = vadd.s32 %v328, 16
        %v343 = vadd.s32 %v335, 16
        %v344 = vsel %vm340, %v342, %v328
        %v345 = vsel %vm341, %v343, %v335
        %vm346 = vcmp.eq.s32.totalorder %v344, 0
        %vm347 = vcmp.eq.s32.totalorder %v345, 0
        %v348 = vsel %vm346, 0.0, 1.0
        %v349 = vsel %vm347, 0.0, 1.0
        %vm350 = vcmp.eq.s32.totalorder %v344, 15
        %vm351 = vcmp.eq.s32.totalorder %v345, 15
        %v352 = vsel %vm350, 0.0, 1.0
        %v353 = vsel %vm351, 0.0, 1.0
        %v356 = vrot.slane %v349, 4
        %vm357 = vcmask 1043456
        %v358 = vsel %vm357, %v348, %v356
        %v360 = vmul.f32 %v317, %v358
        %362 = vst [vmem:[#allocation1] ss:$2 sm:$0xff] %v360
        %v363 = vld.sshfl [vmem:[#allocation1] sm:$0xff pattern:$0x75316420]
        %v364 = vld.sshfl [vmem:[#allocation1 + $0x8] sm:$0xff pattern:$0x75316420]
        %367 = vst [vmem:[#allocation2] sm:$0xf] %v363
        %368 = vst [vmem:[#allocation2 + $0x8] sm:$0xf] %v364
        %s371 = scalar_lea.vmem [#allocation1], 1
        %372 = vst [vmem:[%s371] ss:$2 sm:$0xff] %v317
        %s373 = scalar_lea.vmem [#allocation1], 17
        %374 = vst [vmem:[%s373] ss:$2 sm:$0xff] %v318
        %v375 = vld.sshfl [vmem:[#allocation1] sm:$0xff pattern:$0x75316420]
        %v376 = vld.sshfl [vmem:[#allocation1 + $0x8] sm:$0xff pattern:$0x75316420]
        %v377 = vld.sshfl [vmem:[#allocation1 + $0x10] sm:$0xff pattern:$0x75316420]
        %378 = vrot.lane.b32.xlu0 %v375, 127
        %v379 = vpop.permute.xlu0 %378
        %380 = vrot.lane.b32.xlu0 %v376, 127
        %v381 = vpop.permute.xlu0 %380
        %382 = vrot.lane.b32.xlu0 %v377, 127
        %v383 = vpop.permute.xlu0 %382
        %vm384 = vcmask 1039360
        %v385 = vsel %vm384, %v379, %v381
        %v386 = vsel %vm384, %v381, %v383
        %389 = vst [vmem:[#allocation2] sm:$0xf0] %v385
        %390 = vst [vmem:[#allocation2 + $0x8] sm:$0xf0] %v386
        %v393 = vrot.slane %v353, 4
        %v394 = vsel %vm357, %v352, %v393
        %395 = vrot.lane.b32.xlu0 %v394, 2
        %v396 = vpop.permute.xlu0 %395
        %v397 = vrot.slane %v396, 4
        %vm398 = vcmask 15360
        %v399 = vsel %vm398, %v397, %v396
        %v402 = vmul.f32 %v317, %v399
        %v403 = vmul.f32 %v318, %v397
        %406 = vst [vmem:[#allocation1] ss:$2 sm:$0xff] %v402
        %s407 = scalar_lea.vmem [#allocation1], 16
        %408 = vst [vmem:[%s407] ss:$2 sm:$0xff] %v403
        %v409 = vld.sshfl [vmem:[#allocation1] sm:$0xff pattern:$0x75316420]
        %v410 = vld.sshfl [vmem:[#allocation1 + $0x8] sm:$0xff pattern:$0x75316420]
        %v411 = vld.sshfl [vmem:[#allocation1 + $0x10] sm:$0xff pattern:$0x75316420]
        %412 = vrot.lane.b32.xlu0 %v409, 126
        %v413 = vpop.permute.xlu0 %412
        %414 = vrot.lane.b32.xlu0 %v410, 126
        %v415 = vpop.permute.xlu0 %414
        %416 = vrot.lane.b32.xlu0 %v411, 126
        %v417 = vpop.permute.xlu0 %416
        %vm418 = vcmask 1031168
        %v419 = vsel %vm418, %v413, %v415
        %v420 = vsel %vm418, %v415, %v417
        %423 = vst [vmem:[#allocation2 + $0x10] sm:$0xf] %v419
        %424 = vst [vmem:[#allocation2 + $0x18] sm:$0xf] %v420
        %425 = vrot.lane.b32.xlu0 %v358, 16
        %v426 = vpop.permute.xlu0 %425
        %v427 = vrot.slane %v426, 4
        %vm428 = vcmask 130048
        %v429 = vsel %vm428, %v427, %v426
        %v432 = vmul.f32 %v317, %v429
        %v433 = vmul.f32 %v318, %v427
        %s436 = scalar_lea.vmem [#allocation1], 1
        %437 = vst [vmem:[%s436] ss:$2 sm:$0xff] %v432
        %s438 = scalar_lea.vmem [#allocation1], 17
        %439 = vst [vmem:[%s438] ss:$2 sm:$0xff] %v433
        %v440 = vld.sshfl [vmem:[#allocation1] sm:$0xff pattern:$0x75316420]
        %v441 = vld.sshfl [vmem:[#allocation1 + $0x8] sm:$0xff pattern:$0x75316420]
        %v442 = vld.sshfl [vmem:[#allocation1 + $0x10] sm:$0xff pattern:$0x75316420]
        %443 = vrot.lane.b32.xlu0 %v440, 112
        %v444 = vpop.permute.xlu0 %443
        %445 = vrot.lane.b32.xlu0 %v441, 112
        %v446 = vpop.permute.xlu0 %445
        %447 = vrot.lane.b32.xlu0 %v442, 112
        %v448 = vpop.permute.xlu0 %447
        %vm449 = vcmask 916480
        %v450 = vsel %vm449, %v444, %v446
        %v451 = vsel %vm449, %v446, %v448
        %454 = vst [vmem:[#allocation2 + $0x10] sm:$0xf0] %v450
        %455 = vst [vmem:[#allocation2 + $0x18] sm:$0xf0] %v451
        %456 = vst [vmem:[#allocation1] ss:$2 sm:$0xff] %v317
        %s457 = scalar_lea.vmem [#allocation1], 16
        %458 = vst [vmem:[%s457] ss:$2 sm:$0xff] %v318
        %v459 = vld.sshfl [vmem:[#allocation1] sm:$0xff pattern:$0x75316420]
        %v460 = vld.sshfl [vmem:[#allocation1 + $0x8] sm:$0xff pattern:$0x75316420]
        %v461 = vld.sshfl [vmem:[#allocation1 + $0x10] sm:$0xff pattern:$0x75316420]
        %462 = vrot.lane.b32.xlu0 %v459, 111
        %v463 = vpop.permute.xlu0 %462
        %464 = vrot.lane.b32.xlu0 %v460, 111
        %v465 = vpop.permute.xlu0 %464
        %466 = vrot.lane.b32.xlu0 %v461, 111
        %v467 = vpop.permute.xlu0 %466
        %vm468 = vcmask 908288
        %v469 = vsel %vm468, %v463, %v465
        %v470 = vsel %vm468, %v465, %v467
        %473 = vst [vmem:[#allocation2 + $0x20] sm:$0xf] %v469
        %474 = vst [vmem:[#allocation2 + $0x28] sm:$0xf] %v470
        %475 = vrot.lane.b32.xlu0 %v394, 18
        %v476 = vpop.permute.xlu0 %475
        %v477 = vrot.slane %v476, 4
        %vm478 = vcmask 146432
        %v479 = vsel %vm478, %v477, %v476
        %v482 = vmul.f32 %v317, %v479
        %v483 = vmul.f32 %v318, %v477
        %s486 = scalar_lea.vmem [#allocation1], 1
        %487 = vst [vmem:[%s486] ss:$2 sm:$0xff] %v482
        %s488 = scalar_lea.vmem [#allocation1], 17
        %489 = vst [vmem:[%s488] ss:$2 sm:$0xff] %v483
        %v490 = vld.sshfl [vmem:[#allocation1] sm:$0xff pattern:$0x75316420]
        %v491 = vld.sshfl [vmem:[#allocation1 + $0x8] sm:$0xff pattern:$0x75316420]
        %v492 = vld.sshfl [vmem:[#allocation1 + $0x10] sm:$0xff pattern:$0x75316420]
        %493 = vrot.lane.b32.xlu0 %v490, 110
        %v494 = vpop.permute.xlu0 %493
        %495 = vrot.lane.b32.xlu0 %v491, 110
        %v496 = vpop.permute.xlu0 %495
        %497 = vrot.lane.b32.xlu0 %v492, 110
        %v498 = vpop.permute.xlu0 %497
        %vm499 = vcmask 900096
        %v500 = vsel %vm499, %v494, %v496
        %v501 = vsel %vm499, %v496, %v498
        %504 = vst [vmem:[#allocation2 + $0x20] sm:$0xf0] %v500
        %505 = vst [vmem:[#allocation2 + $0x28] sm:$0xf0] %v501
        %506 = vrot.lane.b32.xlu0 %v358, 32
        %v507 = vpop.permute.xlu0 %506
        %v508 = vrot.slane %v507, 4
        %vm509 = vcmask 261120
        %v510 = vsel %vm509, %v508, %v507
        %v513 = vmul.f32 %v317, %v510
        %v514 = vmul.f32 %v318, %v508
        %517 = vst [vmem:[#allocation1] ss:$2 sm:$0xff] %v513
        %s518 = scalar_lea.vmem [#allocation1], 16
        %519 = vst [vmem:[%s518] ss:$2 sm:$0xff] %v514
        %v520 = vld.sshfl [vmem:[#allocation1] sm:$0xff pattern:$0x75316420]
        %v521 = vld.sshfl [vmem:[#allocation1 + $0x8] sm:$0xff pattern:$0x75316420]
        %v522 = vld.sshfl [vmem:[#allocation1 + $0x10] sm:$0xff pattern:$0x75316420]
        %523 = vrot.lane.b32.xlu0 %v520, 96
        %v524 = vpop.permute.xlu0 %523
        %525 = vrot.lane.b32.xlu0 %v521, 96
        %v526 = vpop.permute.xlu0 %525
        %527 = vrot.lane.b32.xlu0 %v522, 96
        %v528 = vpop.permute.xlu0 %527
        %vm529 = vcmask 785408
        %v530 = vsel %vm529, %v524, %v526
        %v531 = vsel %vm529, %v526, %v528
        %534 = vst [vmem:[#allocation2 + $0x30] sm:$0xf] %v530
        %535 = vst [vmem:[#allocation2 + $0x38] sm:$0xf] %v531
        %s536 = scalar_lea.vmem [#allocation1], 1
        %537 = vst [vmem:[%s536] ss:$2 sm:$0xff] %v317
        %s538 = scalar_lea.vmem [#allocation1], 17
        %539 = vst [vmem:[%s538] ss:$2 sm:$0xff] %v318
        %v540 = vld.sshfl [vmem:[#allocation1] sm:$0xff pattern:$0x75316420]
        %v541 = vld.sshfl [vmem:[#allocation1 + $0x8] sm:$0xff pattern:$0x75316420]
        %v542 = vld.sshfl [vmem:[#allocation1 + $0x10] sm:$0xff pattern:$0x75316420]
        %543 = vrot.lane.b32.xlu0 %v540, 95
        %v544 = vpop.permute.xlu0 %543
        %545 = vrot.lane.b32.xlu0 %v541, 95
        %v546 = vpop.permute.xlu0 %545
        %547 = vrot.lane.b32.xlu0 %v542, 95
        %v548 = vpop.permute.xlu0 %547
        %vm549 = vcmask 777216
        %v550 = vsel %vm549, %v544, %v546
        %v551 = vsel %vm549, %v546, %v548
        %554 = vst [vmem:[#allocation2 + $0x30] sm:$0xf0] %v550
        %555 = vst [vmem:[#allocation2 + $0x38] sm:$0xf0] %v551
        %556 = vrot.lane.b32.xlu0 %v394, 34
        %v557 = vpop.permute.xlu0 %556
        %v558 = vrot.slane %v557, 4
        %vm559 = vcmask 277504
        %v560 = vsel %vm559, %v558, %v557
        %v563 = vmul.f32 %v317, %v560
        %v564 = vmul.f32 %v318, %v558
        %567 = vst [vmem:[#allocation1] ss:$2 sm:$0xff] %v563
        %s568 = scalar_lea.vmem [#allocation1], 16
        %569 = vst [vmem:[%s568] ss:$2 sm:$0xff] %v564
        %v570 = vld.sshfl [vmem:[#allocation1] sm:$0xff pattern:$0x75316420]
        %v571 = vld.sshfl [vmem:[#allocation1 + $0x8] sm:$0xff pattern:$0x75316420]
        %v572 = vld.sshfl [vmem:[#allocation1 + $0x10] sm:$0xff pattern:$0x75316420]
        %573 = vrot.lane.b32.xlu0 %v570, 94
        %v574 = vpop.permute.xlu0 %573
        %575 = vrot.lane.b32.xlu0 %v571, 94
        %v576 = vpop.permute.xlu0 %575
        %577 = vrot.lane.b32.xlu0 %v572, 94
        %v578 = vpop.permute.xlu0 %577
        %vm579 = vcmask 769024
        %v580 = vsel %vm579, %v574, %v576
        %v581 = vsel %vm579, %v576, %v578
        %584 = vst [vmem:[#allocation2 + $0x40] sm:$0xf] %v580
        %585 = vst [vmem:[#allocation2 + $0x48] sm:$0xf] %v581
        %v586 = vld [vmem:[#allocation2] sm:$0xff]
        %v587 = vld [vmem:[#allocation2 + $0x8] sm:$0xff]
        %v588 = vld [vmem:[#allocation2 + $0x10] sm:$0xff]
        %v589 = vld [vmem:[#allocation2 + $0x18] sm:$0xff]
        %v590 = vld [vmem:[#allocation2 + $0x20] sm:$0xff]
        %v591 = vld [vmem:[#allocation2 + $0x28] sm:$0xff]
        %v592 = vld [vmem:[#allocation2 + $0x30] sm:$0xff]
        %v593 = vld [vmem:[#allocation2 + $0x38] sm:$0xff]
        %v594 = vld [vmem:[#allocation2 + $0x40] sm:$0xf]
        %v595 = vld [vmem:[#allocation2 + $0x48] sm:$0xf]
        %v596 = vld [vmem:[%s1] sm:$0xff]
        %v597 = vld [vmem:[%s1 + $0x8] sm:$0xff]
        %v598 = vld [vmem:[%s2] sm:$0xff]
        %v599 = vld [vmem:[%s2 + $0x8] sm:$0xff]
        %601 = vset.pattern.permute.xlu0 0
        %602 = vperm.xlu0 %601, %v598
        %v603 = vpop.permute.xlu0 %602
        %606 = vset.pattern.permute.xlu0 0
        %607 = vperm.xlu0 %606, %v599
        %v608 = vpop.permute.xlu0 %607
        %vm610 = vcmask 293888
        %v612 = vsel %vm610, %v596, 0
        %v615 = vsel %vm610, %v597, 0
        %v618 = vsel %vm357, %v594, 0
        %v621 = vsel %vm357, %v595, 0
        %623 = vmatpush.msra.mxu0 0.0
        %624 = vmatpush.msra.mxu0 0.0
        %625 = vmatpush.msra.mxu0 0.0
        %626 = vmatpush.msra.mxu0 0.0
        %627 = vmatpush.msra.mxu0 0.0
        %628 = vmatpush.msra.mxu0 0.0
        %629 = vmatpush.msra.mxu0 0.0
        %630 = vmatpush.msra.mxu0 0.0
        %631 = vmatpush.msra.mxu0 0.0
        %632 = vmatpush.msra.mxu0 0.0
        %633 = vmatpush.msra.mxu0 0.0
        %634 = vmatpush.msra.mxu0 %v618
        %635 = vmatpush.msra.mxu0 %v592
        %636 = vmatpush.msra.mxu0 %v590
        %637 = vmatpush.msra.mxu0 %v588
        %638 = vmatpush.msra.mxu0 %v586
        %639 = vmatmul.f32.gmra.mxu0 %v612
        %v640 = vpop.f32.mrf.mxu0
        %v641 = vadd.f32 %v603, %v640
        %642 = vmatmul.f32.gmra.mxu0 %v615
        %v643 = vpop.f32.mrf.mxu0
        %v644 = vadd.f32 %v608, %v643
        %645 = vdwg.mxu0
        %646 = vmatpush.msra.mxu0 0.0
        %647 = vmatpush.msra.mxu0 0.0
        %648 = vmatpush.msra.mxu0 0.0
        %649 = vmatpush.msra.mxu0 0.0
        %650 = vmatpush.msra.mxu0 0.0
        %651 = vmatpush.msra.mxu0 0.0
        %652 = vmatpush.msra.mxu0 0.0
        %653 = vmatpush.msra.mxu0 0.0
        %654 = vmatpush.msra.mxu0 0.0
        %655 = vmatpush.msra.mxu0 0.0
        %656 = vmatpush.msra.mxu0 0.0
        %657 = vmatpush.msra.mxu0 %v621
        %658 = vmatpush.msra.mxu0 %v593
        %659 = vmatpush.msra.mxu0 %v591
        %660 = vmatpush.msra.mxu0 %v589
        %661 = vmatpush.msra.mxu0 %v587
        %662 = vmatmul.f32.gmra.mxu0 %v612
        %v663 = vpop.f32.mrf.mxu0
        %v664 = vadd.f32 %v603, %v663
        %665 = vmatmul.f32.gmra.mxu0 %v615
        %v666 = vpop.f32.mrf.mxu0
        %v667 = vadd.f32 %v608, %v666
        %668 = vdwg.mxu0
        %669 = vst [vmem:[#allocation3] sm:$0xff] %v641
        %670 = vst [vmem:[#allocation3 + $0x8] sm:$0xff] %v664
        %671 = vst [vmem:[#allocation3 + $0x10] sm:$0xff] %v644
        %672 = vst [vmem:[#allocation3 + $0x18] sm:$0xff] %v667
        %v673 = vld [vmem:[#allocation3] sm:$0x3]
        %v674 = vld [vmem:[#allocation3 + $0x8] sm:$0x3]
        %vm675 = vcmask 1041408
        %v676 = vsel %vm675, %v673, 0.0
        %v677 = vsel %vm675, %v674, 0.0
        %v678 = vadd.f32 %v676, %v677
        %679 = vadd.xlane.f32.xlu0 %v678
        %v680 = vpop.xlane.xlu0 %679
        %v681 = vsel %vm675, %v680, 0.0
        %v682 = vrot.slane %v681, 4
        %v683 = vadd.f32 %v681, %v682
        %v684 = vrot.slane %v683, 2
        %v685 = vadd.f32 %v683, %v684
        %v686 = vrot.slane %v685, 1
        %v687 = vadd.f32 %v685, %v686
        %v688 = vmul.f32 %v687, 0.001953125
        %v689 = vmul.f32 %v673, %v673
        %v690 = vmul.f32 %v674, %v674
        %v691 = vsel %vm675, %v689, 0.0
        %v692 = vsel %vm675, %v690, 0.0
        %v693 = vadd.f32 %v691, %v692
        %694 = vadd.xlane.f32.xlu0 %v693
        %v695 = vpop.xlane.xlu0 %694
        %v696 = vsel %vm675, %v695, 0.0
        %v697 = vrot.slane %v696, 4
        %v698 = vadd.f32 %v696, %v697
        %v699 = vrot.slane %v698, 2
        %v700 = vadd.f32 %v698, %v699
        %v701 = vrot.slane %v700, 1
        %v702 = vadd.f32 %v700, %v701
        %v703 = vmul.f32 %v702, 0.001953125
        %v704 = vmul.f32 %v688, %v688
        %v705 = vsub.f32 %v703, %v704
        %v706 = vmax.f32 %v705, 0.0
        %v707 = vadd.f32 %v706, 1e-05
        %v708 = vrsqrt.pop %v707
        %v709 = vmul.f32 %v708, %v707
        %v710 = vmul.f32 %v709, %v708
        %v711 = vmul.f32 0.5, %v710
        %v712 = vsub.f32 1.5, %v711
        %v713 = vmul.f32 %v708, %v712
        %vm714 = vweird.f32 %v707
        %vm715 = vweird.f32 %v708
        %vm716 = vmor %vm714, %vm715
        %v717 = vsel %vm716, %v708, %v713
        %v718 = vsub.f32 %v673, %v688
        %v719 = vsub.f32 %v674, %v688
        %v720 = vmul.f32 %v718, %v717
        %v721 = vmul.f32 %v719, %v717
        %v722 = vld [vmem:[%s3] sm:$0x3]
        %724 = vset.pattern.permute.xlu0 0
        %725 = vperm.xlu0 %724, %v722
        %v726 = vpop.permute.xlu0 %725
        %v728 = vmul.f32 %v720, %v726
        %v729 = vmul.f32 %v721, %v726
        %v730 = vld [vmem:[%s4] sm:$0x3]
        %732 = vset.pattern.permute.xlu0 0
        %733 = vperm.xlu0 %732, %v730
        %v734 = vpop.permute.xlu0 %733
        %v736 = vadd.f32 %v728, %v734
        %v737 = vadd.f32 %v729, %v734
        %v738 = vld [vmem:[%s311] sm:$0x3]
        %v739 = vadd.f32 %v738, 1.0
        %741 = vset.pattern.permute.xlu0 0
        %742 = vperm.xlu0 %741, %v739
        %v743 = vpop.permute.xlu0 %742
        %v745 = vmul.f32 %v736, %v743
        %v746 = vmul.f32 %v737, %v743
        %v747 = vld [vmem:[%s316] sm:$0x3]
        %749 = vset.pattern.permute.xlu0 0
        %750 = vperm.xlu0 %749, %v747
        %v751 = vpop.permute.xlu0 %750
        %v753 = vadd.f32 %v745, %v751
        %v754 = vadd.f32 %v746, %v751
        %v755 = vmul.f32 %v753, 0.5
        %v756 = vmul.f32 %v754, 0.5
        %v757 = vmul.f32 %v753, 0.70710677
        %v758 = vmul.f32 %v754, 0.70710677
        %v759 = vmul.f32 %v757, %v757
        %v760 = vmin.f32 16.0, %v759
        %v761 = vmul.f32 %v760, 2.1237322e-06
        %v762 = vadd.f32 %v761, 0.00028619796
        %v763 = vmul.f32 %v760, %v762
        %v764 = vadd.f32 %v763, 0.0036580483
        %v765 = vmul.f32 %v760, %v764
        %v766 = vadd.f32 %v765, 0.05243302
        %v767 = vmul.f32 %v760, %v766
        %v768 = vadd.f32 %v767, 0.18741608
        %v769 = vmul.f32 %v760, %v768
        %v770 = vadd.f32 %v769, 1.1283791
        %v771 = vmul.f32 %v757, %v770
        %v772 = vmul.f32 %v760, 3.8918573e-05
        %v773 = vadd.f32 %v772, 0.001143296
        %v774 = vmul.f32 %v760, %v773
        %v775 = vadd.f32 %v774, 0.014752088
        %v776 = vmul.f32 %v760, %v775
        %v777 = vadd.f32 %v776, 0.112945676
        %v778 = vmul.f32 %v760, %v777
        %v779 = vadd.f32 %v778, 0.4994258
        %v780 = vmul.f32 %v760, %v779
        %v781 = vadd.f32 %v780, 1.0
        %v782 = vrcp.pop %v781
        %v783 = vmul.f32 %v781, %v782
        %v784 = vsub.f32 1.0, %v783
        %v785 = vmul.f32 %v782, %v784
        %v786 = vadd.f32 %v782, %v785
        %vm787 = vweird.f32 %v781
        %vm788 = vweird.f32 %v782
        %vm789 = vmor %vm787, %vm788
        %v790 = vsel %vm789, %v782, %v786
        %v791 = vand.u32 2147483647, %v781
        %vm792 = vcmp.eq.f32.partialorder %v791, 8.507059e+37
        %v793 = vand.u32 %v781, 2147483648
        %v794 = vor.u32 1.1754944e-38, %v793
        %v795 = vsel %vm792, %v794, %v790
        %v796 = vmul.f32 %v771, %v795
        %v797 = vmin.f32 %v796, 1.0
        %v798 = vmax.f32 %v797, -1.0
        %v799 = vmul.f32 %v758, %v758
        %v800 = vmin.f32 16.0, %v799
        %v801 = vmul.f32 %v800, 2.1237322e-06
        %v802 = vadd.f32 %v801, 0.00028619796
        %v803 = vmul.f32 %v800, %v802
        %v804 = vadd.f32 %v803, 0.0036580483
        %v805 = vmul.f32 %v800, %v804
        %v806 = vadd.f32 %v805, 0.05243302
        %v807 = vmul.f32 %v800, %v806
        %v808 = vadd.f32 %v807, 0.18741608
        %v809 = vmul.f32 %v800, %v808
        %v810 = vadd.f32 %v809, 1.1283791
        %v811 = vmul.f32 %v758, %v810
        %v812 = vmul.f32 %v800, 3.8918573e-05
        %v813 = vadd.f32 %v812, 0.001143296
        %v814 = vmul.f32 %v800, %v813
        %v815 = vadd.f32 %v814, 0.014752088
        %v816 = vmul.f32 %v800, %v815
        %v817 = vadd.f32 %v816, 0.112945676
        %v818 = vmul.f32 %v800, %v817
        %v819 = vadd.f32 %v818, 0.4994258
        %v820 = vmul.f32 %v800, %v819
        %v821 = vadd.f32 %v820, 1.0
        %v822 = vrcp.pop %v821
        %v823 = vmul.f32 %v821, %v822
        %v824 = vsub.f32 1.0, %v823
        %v825 = vmul.f32 %v822, %v824
        %v826 = vadd.f32 %v822, %v825
        %vm827 = vweird.f32 %v821
        %vm828 = vweird.f32 %v822
        %vm829 = vmor %vm827, %vm828
        %v830 = vsel %vm829, %v822, %v826
        %v831 = vand.u32 2147483647, %v821
        %vm832 = vcmp.eq.f32.partialorder %v831, 8.507059e+37
        %v833 = vand.u32 %v821, 2147483648
        %v834 = vor.u32 1.1754944e-38, %v833
        %v835 = vsel %vm832, %v834, %v830
        %v836 = vmul.f32 %v811, %v835
        %v837 = vmin.f32 %v836, 1.0
        %v838 = vmax.f32 %v837, -1.0
        %v839 = vadd.f32 %v798, 1.0
        %v840 = vadd.f32 %v838, 1.0
        %v841 = vmul.f32 %v755, %v839
        %v842 = vmul.f32 %v756, %v840
        %843 = vst [vmem:[%s301] sm:$0x3] %v841
        %844 = vst [vmem:[%s301 + $0x8] sm:$0x3] %v842
        %v845 = vld [vmem:[#allocation3] sm:$0xc]
        %v846 = vld [vmem:[#allocation3 + $0x8] sm:$0xc]
        %vm847 = vcmask 1043458
        %v848 = vsel %vm847, %v845, 0.0
        %v849 = vsel %vm847, %v846, 0.0
        %v850 = vadd.f32 %v848, %v849
        %851 = vadd.xlane.f32.xlu0 %v850
        %v852 = vpop.xlane.xlu0 %851
        %v854 = vrot.slane %v852, 2
        %v856 = vsel %vm675, %v854, 0.0
        %v857 = vrot.slane %v856, 4
        %v858 = vadd.f32 %v856, %v857
        %v859 = vrot.slane %v858, 2
        %v860 = vadd.f32 %v858, %v859
        %v861 = vrot.slane %v860, 1
        %v862 = vadd.f32 %v860, %v861
        %v863 = vmul.f32 %v862, 0.001953125
        %v864 = vmul.f32 %v845, %v845
        %v865 = vmul.f32 %v846, %v846
        %v866 = vsel %vm847, %v864, 0.0
        %v867 = vsel %vm847, %v865, 0.0
        %v868 = vadd.f32 %v866, %v867
        %869 = vadd.xlane.f32.xlu0 %v868
        %v870 = vpop.xlane.xlu0 %869
        %v872 = vrot.slane %v870, 2
        %v874 = vsel %vm675, %v872, 0.0
        %v875 = vrot.slane %v874, 4
        %v876 = vadd.f32 %v874, %v875
        %v877 = vrot.slane %v876, 2
        %v878 = vadd.f32 %v876, %v877
        %v879 = vrot.slane %v878, 1
        %v880 = vadd.f32 %v878, %v879
        %v881 = vmul.f32 %v880, 0.001953125
        %v882 = vmul.f32 %v863, %v863
        %v883 = vsub.f32 %v881, %v882
        %v884 = vmax.f32 %v883, 0.0
        %v885 = vadd.f32 %v884, 1e-05
        %v886 = vrsqrt.pop %v885
        %v887 = vmul.f32 %v886, %v885
        %v888 = vmul.f32 %v887, %v886
        %v889 = vmul.f32 0.5, %v888
        %v890 = vsub.f32 1.5, %v889
        %v891 = vmul.f32 %v886, %v890
        %vm892 = vweird.f32 %v885
        %vm893 = vweird.f32 %v886
        %vm894 = vmor %vm892, %vm893
        %v895 = vsel %vm894, %v886, %v891
        %v896 = vsub.f32 %v845, %v863
        %v897 = vsub.f32 %v846, %v863
        %v898 = vmul.f32 %v896, %v895
        %v899 = vmul.f32 %v897, %v895
        %v900 = vld [vmem:[%s3 + $0x2] sm:$0x3]
        %902 = vset.pattern.permute.xlu0 0
        %903 = vperm.xlu0 %902, %v900
        %v904 = vpop.permute.xlu0 %903
        %v905 = vrot.slane %v904, 6
        %v907 = vmul.f32 %v898, %v905
        %v908 = vmul.f32 %v899, %v905
        %v909 = vld [vmem:[%s4 + $0x2] sm:$0x3]
        %911 = vset.pattern.permute.xlu0 0
        %912 = vperm.xlu0 %911, %v909
        %v913 = vpop.permute.xlu0 %912
        %v914 = vrot.slane %v913, 6
        %v916 = vadd.f32 %v907, %v914
        %v917 = vadd.f32 %v908, %v914
        %v918 = vld [vmem:[%s311 + $0x2] sm:$0x3]
        %v919 = vadd.f32 %v918, 1.0
        %921 = vset.pattern.permute.xlu0 0
        %922 = vperm.xlu0 %921, %v919
        %v923 = vpop.permute.xlu0 %922
        %v924 = vrot.slane %v923, 6
        %v926 = vmul.f32 %v916, %v924
        %v927 = vmul.f32 %v917, %v924
        %v928 = vld [vmem:[%s316 + $0x2] sm:$0x3]
        %930 = vset.pattern.permute.xlu0 0
        %931 = vperm.xlu0 %930, %v928
        %v932 = vpop.permute.xlu0 %931
        %v933 = vrot.slane %v932, 6
        %v935 = vadd.f32 %v926, %v933
        %v936 = vadd.f32 %v927, %v933
        %v937 = vmul.f32 %v935, 0.5
        %v938 = vmul.f32 %v936, 0.5
        %v939 = vmul.f32 %v935, 0.70710677
        %v940 = vmul.f32 %v936, 0.70710677
        %v941 = vmul.f32 %v939, %v939
        %v942 = vmin.f32 16.0, %v941
        %v943 = vmul.f32 %v942, 2.1237322e-06
        %v944 = vadd.f32 %v943, 0.00028619796
        %v945 = vmul.f32 %v942, %v944
        %v946 = vadd.f32 %v945, 0.0036580483
        %v947 = vmul.f32 %v942, %v946
        %v948 = vadd.f32 %v947, 0.05243302
        %v949 = vmul.f32 %v942, %v948
        %v950 = vadd.f32 %v949, 0.18741608
        %v951 = vmul.f32 %v942, %v950
        %v952 = vadd.f32 %v951, 1.1283791
        %v953 = vmul.f32 %v939, %v952
        %v954 = vmul.f32 %v942, 3.8918573e-05
        %v955 = vadd.f32 %v954, 0.001143296
        %v956 = vmul.f32 %v942, %v955
        %v957 = vadd.f32 %v956, 0.014752088
        %v958 = vmul.f32 %v942, %v957
        %v959 = vadd.f32 %v958, 0.112945676
        %v960 = vmul.f32 %v942, %v959
        %v961 = vadd.f32 %v960, 0.4994258
        %v962 = vmul.f32 %v942, %v961
        %v963 = vadd.f32 %v962, 1.0
        %v964 = vrcp.pop %v963
        %v965 = vmul.f32 %v963, %v964
        %v966 = vsub.f32 1.0, %v965
        %v967 = vmul.f32 %v964, %v966
        %v968 = vadd.f32 %v964, %v967
        %vm969 = vweird.f32 %v963
        %vm970 = vweird.f32 %v964
        %vm971 = vmor %vm969, %vm970
        %v972 = vsel %vm971, %v964, %v968
        %v973 = vand.u32 2147483647, %v963
        %vm974 = vcmp.eq.f32.partialorder %v973, 8.507059e+37
        %v975 = vand.u32 %v963, 2147483648
        %v976 = vor.u32 1.1754944e-38, %v975
        %v977 = vsel %vm974, %v976, %v972
        %v978 = vmul.f32 %v953, %v977
        %v979 = vmin.f32 %v978, 1.0
        %v980 = vmax.f32 %v979, -1.0
        %v981 = vmul.f32 %v940, %v940
        %v982 = vmin.f32 16.0, %v981
        %v983 = vmul.f32 %v982, 2.1237322e-06
        %v984 = vadd.f32 %v983, 0.00028619796
        %v985 = vmul.f32 %v982, %v984
        %v986 = vadd.f32 %v985, 0.0036580483
        %v987 = vmul.f32 %v982, %v986
        %v988 = vadd.f32 %v987, 0.05243302
        %v989 = vmul.f32 %v982, %v988
        %v990 = vadd.f32 %v989, 0.18741608
        %v991 = vmul.f32 %v982, %v990
        %v992 = vadd.f32 %v991, 1.1283791
        %v993 = vmul.f32 %v940, %v992
        %v994 = vmul.f32 %v982, 3.8918573e-05
        %v995 = vadd.f32 %v994, 0.001143296
        %v996 = vmul.f32 %v982, %v995
        %v997 = vadd.f32 %v996, 0.014752088
        %v998 = vmul.f32 %v982, %v997
        %v999 = vadd.f32 %v998, 0.112945676
        %v1000 = vmul.f32 %v982, %v999
        %v1001 = vadd.f32 %v1000, 0.4994258
        %v1002 = vmul.f32 %v982, %v1001
        %v1003 = vadd.f32 %v1002, 1.0
        %v1004 = vrcp.pop %v1003
        %v1005 = vmul.f32 %v1003, %v1004
        %v1006 = vsub.f32 1.0, %v1005
        %v1007 = vmul.f32 %v1004, %v1006
        %v1008 = vadd.f32 %v1004, %v1007
        %vm1009 = vweird.f32 %v1003
        %vm1010 = vweird.f32 %v1004
        %vm1011 = vmor %vm1009, %vm1010
        %v1012 = vsel %vm1011, %v1004, %v1008
        %v1013 = vand.u32 2147483647, %v1003
        %vm1014 = vcmp.eq.f32.partialorder %v1013, 8.507059e+37
        %v1015 = vand.u32 %v1003, 2147483648
        %v1016 = vor.u32 1.1754944e-38, %v1015
        %v1017 = vsel %vm1014, %v1016, %v1012
        %v1018 = vmul.f32 %v993, %v1017
        %v1019 = vmin.f32 %v1018, 1.0
        %v1020 = vmax.f32 %v1019, -1.0
        %v1021 = vadd.f32 %v980, 1.0
        %v1022 = vadd.f32 %v1020, 1.0
        %v1023 = vmul.f32 %v937, %v1021
        %v1024 = vmul.f32 %v938, %v1022
        %1025 = vst [vmem:[%s301] sm:$0xc] %v1023
        %1026 = vst [vmem:[%s301 + $0x8] sm:$0xc] %v1024
        %v1027 = vld [vmem:[#allocation3] sm:$0x30]
        %v1028 = vld [vmem:[#allocation3 + $0x8] sm:$0x30]
        %vm1029 = vcmask 1045508
        %v1030 = vsel %vm1029, %v1027, 0.0
        %v1031 = vsel %vm1029, %v1028, 0.0
        %v1032 = vadd.f32 %v1030, %v1031
        %1033 = vadd.xlane.f32.xlu0 %v1032
        %v1034 = vpop.xlane.xlu0 %1033
        %v1036 = vrot.slane %v1034, 4
        %v1038 = vsel %vm675, %v1036, 0.0
        %v1039 = vrot.slane %v1038, 4
        %v1040 = vadd.f32 %v1038, %v1039
        %v1041 = vrot.slane %v1040, 2
        %v1042 = vadd.f32 %v1040, %v1041
        %v1043 = vrot.slane %v1042, 1
        %v1044 = vadd.f32 %v1042, %v1043
        %v1045 = vmul.f32 %v1044, 0.001953125
        %v1046 = vmul.f32 %v1027, %v1027
        %v1047 = vmul.f32 %v1028, %v1028
        %v1048 = vsel %vm1029, %v1046, 0.0
        %v1049 = vsel %vm1029, %v1047, 0.0
        %v1050 = vadd.f32 %v1048, %v1049
        %1051 = vadd.xlane.f32.xlu0 %v1050
        %v1052 = vpop.xlane.xlu0 %1051
        %v1054 = vrot.slane %v1052, 4
        %v1056 = vsel %vm675, %v1054, 0.0
        %v1057 = vrot.slane %v1056, 4
        %v1058 = vadd.f32 %v1056, %v1057
        %v1059 = vrot.slane %v1058, 2
        %v1060 = vadd.f32 %v1058, %v1059
        %v1061 = vrot.slane %v1060, 1
        %v1062 = vadd.f32 %v1060, %v1061
        %v1063 = vmul.f32 %v1062, 0.001953125
        %v1064 = vmul.f32 %v1045, %v1045
        %v1065 = vsub.f32 %v1063, %v1064
        %v1066 = vmax.f32 %v1065, 0.0
        %v1067 = vadd.f32 %v1066, 1e-05
        %v1068 = vrsqrt.pop %v1067
        %v1069 = vmul.f32 %v1068, %v1067
        %v1070 = vmul.f32 %v1069, %v1068
        %v1071 = vmul.f32 0.5, %v1070
        %v1072 = vsub.f32 1.5, %v1071
        %v1073 = vmul.f32 %v1068, %v1072
        %vm1074 = vweird.f32 %v1067
        %vm1075 = vweird.f32 %v1068
        %vm1076 = vmor %vm1074, %vm1075
        %v1077 = vsel %vm1076, %v1068, %v1073
        %v1078 = vsub.f32 %v1027, %v1045
        %v1079 = vsub.f32 %v1028, %v1045
        %v1080 = vmul.f32 %v1078, %v1077
        %v1081 = vmul.f32 %v1079, %v1077
        %v1082 = vld [vmem:[%s3 + $0x4] sm:$0x3]
        %1084 = vset.pattern.permute.xlu0 0
        %1085 = vperm.xlu0 %1084, %v1082
        %v1086 = vpop.permute.xlu0 %1085
        %v1087 = vrot.slane %v1086, 4
        %v1089 = vmul.f32 %v1080, %v1087
        %v1090 = vmul.f32 %v1081, %v1087
        %v1091 = vld [vmem:[%s4 + $0x4] sm:$0x3]
        %1093 = vset.pattern.permute.xlu0 0
        %1094 = vperm.xlu0 %1093, %v1091
        %v1095 = vpop.permute.xlu0 %1094
        %v1096 = vrot.slane %v1095, 4
        %v1098 = vadd.f32 %v1089, %v1096
        %v1099 = vadd.f32 %v1090, %v1096
        %v1100 = vld [vmem:[%s311 + $0x4] sm:$0x3]
        %v1101 = vadd.f32 %v1100, 1.0
        %1103 = vset.pattern.permute.xlu0 0
        %1104 = vperm.xlu0 %1103, %v1101
        %v1105 = vpop.permute.xlu0 %1104
        %v1106 = vrot.slane %v1105, 4
        %v1108 = vmul.f32 %v1098, %v1106
        %v1109 = vmul.f32 %v1099, %v1106
        %v1110 = vld [vmem:[%s316 + $0x4] sm:$0x3]
        %1112 = vset.pattern.permute.xlu0 0
        %1113 = vperm.xlu0 %1112, %v1110
        %v1114 = vpop.permute.xlu0 %1113
        %v1115 = vrot.slane %v1114, 4
        %v1117 = vadd.f32 %v1108, %v1115
        %v1118 = vadd.f32 %v1109, %v1115
        %v1119 = vmul.f32 %v1117, 0.5
        %v1120 = vmul.f32 %v1118, 0.5
        %v1121 = vmul.f32 %v1117, 0.70710677
        %v1122 = vmul.f32 %v1118, 0.70710677
        %v1123 = vmul.f32 %v1121, %v1121
        %v1124 = vmin.f32 16.0, %v1123
        %v1125 = vmul.f32 %v1124, 2.1237322e-06
        %v1126 = vadd.f32 %v1125, 0.00028619796
        %v1127 = vmul.f32 %v1124, %v1126
        %v1128 = vadd.f32 %v1127, 0.0036580483
        %v1129 = vmul.f32 %v1124, %v1128
        %v1130 = vadd.f32 %v1129, 0.05243302
        %v1131 = vmul.f32 %v1124, %v1130
        %v1132 = vadd.f32 %v1131, 0.18741608
        %v1133 = vmul.f32 %v1124, %v1132
        %v1134 = vadd.f32 %v1133, 1.1283791
        %v1135 = vmul.f32 %v1121, %v1134
        %v1136 = vmul.f32 %v1124, 3.8918573e-05
        %v1137 = vadd.f32 %v1136, 0.001143296
        %v1138 = vmul.f32 %v1124, %v1137
        %v1139 = vadd.f32 %v1138, 0.014752088
        %v1140 = vmul.f32 %v1124, %v1139
        %v1141 = vadd.f32 %v1140, 0.112945676
        %v1142 = vmul.f32 %v1124, %v1141
        %v1143 = vadd.f32 %v1142, 0.4994258
        %v1144 = vmul.f32 %v1124, %v1143
        %v1145 = vadd.f32 %v1144, 1.0
        %v1146 = vrcp.pop %v1145
        %v1147 = vmul.f32 %v1145, %v1146
        %v1148 = vsub.f32 1.0, %v1147
        %v1149 = vmul.f32 %v1146, %v1148
        %v1150 = vadd.f32 %v1146, %v1149
        %vm1151 = vweird.f32 %v1145
        %vm1152 = vweird.f32 %v1146
        %vm1153 = vmor %vm1151, %vm1152
        %v1154 = vsel %vm1153, %v1146, %v1150
        %v1155 = vand.u32 2147483647, %v1145
        %vm1156 = vcmp.eq.f32.partialorder %v1155, 8.507059e+37
        %v1157 = vand.u32 %v1145, 2147483648
        %v1158 = vor.u32 1.1754944e-38, %v1157
        %v1159 = vsel %vm1156, %v1158, %v1154
        %v1160 = vmul.f32 %v1135, %v1159
        %v1161 = vmin.f32 %v1160, 1.0
        %v1162 = vmax.f32 %v1161, -1.0
        %v1163 = vmul.f32 %v1122, %v1122
        %v1164 = vmin.f32 16.0, %v1163
        %v1165 = vmul.f32 %v1164, 2.1237322e-06
        %v1166 = vadd.f32 %v1165, 0.00028619796
        %v1167 = vmul.f32 %v1164, %v1166
        %v1168 = vadd.f32 %v1167, 0.0036580483
        %v1169 = vmul.f32 %v1164, %v1168
        %v1170 = vadd.f32 %v1169, 0.05243302
        %v1171 = vmul.f32 %v1164, %v1170
        %v1172 = vadd.f32 %v1171, 0.18741608
        %v1173 = vmul.f32 %v1164, %v1172
        %v1174 = vadd.f32 %v1173, 1.1283791
        %v1175 = vmul.f32 %v1122, %v1174
        %v1176 = vmul.f32 %v1164, 3.8918573e-05
        %v1177 = vadd.f32 %v1176, 0.001143296
        %v1178 = vmul.f32 %v1164, %v1177
        %v1179 = vadd.f32 %v1178, 0.014752088
        %v1180 = vmul.f32 %v1164, %v1179
        %v1181 = vadd.f32 %v1180, 0.112945676
        %v1182 = vmul.f32 %v1164, %v1181
        %v1183 = vadd.f32 %v1182, 0.4994258
        %v1184 = vmul.f32 %v1164, %v1183
        %v1185 = vadd.f32 %v1184, 1.0
        %v1186 = vrcp.pop %v1185
        %v1187 = vmul.f32 %v1185, %v1186
        %v1188 = vsub.f32 1.0, %v1187
        %v1189 = vmul.f32 %v1186, %v1188
        %v1190 = vadd.f32 %v1186, %v1189
        %vm1191 = vweird.f32 %v1185
        %vm1192 = vweird.f32 %v1186
        %vm1193 = vmor %vm1191, %vm1192
        %v1194 = vsel %vm1193, %v1186, %v1190
        %v1195 = vand.u32 2147483647, %v1185
        %vm1196 = vcmp.eq.f32.partialorder %v1195, 8.507059e+37
        %v1197 = vand.u32 %v1185, 2147483648
        %v1198 = vor.u32 1.1754944e-38, %v1197
        %v1199 = vsel %vm1196, %v1198, %v1194
        %v1200 = vmul.f32 %v1175, %v1199
        %v1201 = vmin.f32 %v1200, 1.0
        %v1202 = vmax.f32 %v1201, -1.0
        %v1203 = vadd.f32 %v1162, 1.0
        %v1204 = vadd.f32 %v1202, 1.0
        %v1205 = vmul.f32 %v1119, %v1203
        %v1206 = vmul.f32 %v1120, %v1204
        %1207 = vst [vmem:[%s301] sm:$0x30] %v1205
        %1208 = vst [vmem:[%s301 + $0x8] sm:$0x30] %v1206
        %v1209 = vld [vmem:[#allocation3] sm:$0xc0]
        %v1210 = vld [vmem:[#allocation3 + $0x8] sm:$0xc0]
        %vm1211 = vcmask 1047558
        %v1212 = vsel %vm1211, %v1209, 0.0
        %v1213 = vsel %vm1211, %v1210, 0.0
        %v1214 = vadd.f32 %v1212, %v1213
        %1215 = vadd.xlane.f32.xlu0 %v1214
        %v1216 = vpop.xlane.xlu0 %1215
        %v1218 = vrot.slane %v1216, 6
        %v1220 = vsel %vm675, %v1218, 0.0
        %v1221 = vrot.slane %v1220, 4
        %v1222 = vadd.f32 %v1220, %v1221
        %v1223 = vrot.slane %v1222, 2
        %v1224 = vadd.f32 %v1222, %v1223
        %v1225 = vrot.slane %v1224, 1
        %v1226 = vadd.f32 %v1224, %v1225
        %v1227 = vmul.f32 %v1226, 0.001953125
        %v1228 = vmul.f32 %v1209, %v1209
        %v1229 = vmul.f32 %v1210, %v1210
        %v1230 = vsel %vm1211, %v1228, 0.0
        %v1231 = vsel %vm1211, %v1229, 0.0
        %v1232 = vadd.f32 %v1230, %v1231
        %1233 = vadd.xlane.f32.xlu0 %v1232
        %v1234 = vpop.xlane.xlu0 %1233
        %v1236 = vrot.slane %v1234, 6
        %v1238 = vsel %vm675, %v1236, 0.0
        %v1239 = vrot.slane %v1238, 4
        %v1240 = vadd.f32 %v1238, %v1239
        %v1241 = vrot.slane %v1240, 2
        %v1242 = vadd.f32 %v1240, %v1241
        %v1243 = vrot.slane %v1242, 1
        %v1244 = vadd.f32 %v1242, %v1243
        %v1245 = vmul.f32 %v1244, 0.001953125
        %v1246 = vmul.f32 %v1227, %v1227
        %v1247 = vsub.f32 %v1245, %v1246
        %v1248 = vmax.f32 %v1247, 0.0
        %v1249 = vadd.f32 %v1248, 1e-05
        %v1250 = vrsqrt.pop %v1249
        %v1251 = vmul.f32 %v1250, %v1249
        %v1252 = vmul.f32 %v1251, %v1250
        %v1253 = vmul.f32 0.5, %v1252
        %v1254 = vsub.f32 1.5, %v1253
        %v1255 = vmul.f32 %v1250, %v1254
        %vm1256 = vweird.f32 %v1249
        %vm1257 = vweird.f32 %v1250
        %vm1258 = vmor %vm1256, %vm1257
        %v1259 = vsel %vm1258, %v1250, %v1255
        %v1260 = vsub.f32 %v1209, %v1227
        %v1261 = vsub.f32 %v1210, %v1227
        %v1262 = vmul.f32 %v1260, %v1259
        %v1263 = vmul.f32 %v1261, %v1259
        %v1264 = vld [vmem:[%s3 + $0x6] sm:$0x3]
        %1266 = vset.pattern.permute.xlu0 0
        %1267 = vperm.xlu0 %1266, %v1264
        %v1268 = vpop.permute.xlu0 %1267
        %v1269 = vrot.slane %v1268, 2
        %v1271 = vmul.f32 %v1262, %v1269
        %v1272 = vmul.f32 %v1263, %v1269
        %v1273 = vld [vmem:[%s4 + $0x6] sm:$0x3]
        %1275 = vset.pattern.permute.xlu0 0
        %1276 = vperm.xlu0 %1275, %v1273
        %v1277 = vpop.permute.xlu0 %1276
        %v1278 = vrot.slane %v1277, 2
        %v1280 = vadd.f32 %v1271, %v1278
        %v1281 = vadd.f32 %v1272, %v1278
        %v1282 = vld [vmem:[%s311 + $0x6] sm:$0x3]
        %v1283 = vadd.f32 %v1282, 1.0
        %1285 = vset.pattern.permute.xlu0 0
        %1286 = vperm.xlu0 %1285, %v1283
        %v1287 = vpop.permute.xlu0 %1286
        %v1288 = vrot.slane %v1287, 2
        %v1290 = vmul.f32 %v1280, %v1288
        %v1291 = vmul.f32 %v1281, %v1288
        %v1292 = vld [vmem:[%s316 + $0x6] sm:$0x3]
        %1294 = vset.pattern.permute.xlu0 0
        %1295 = vperm.xlu0 %1294, %v1292
        %v1296 = vpop.permute.xlu0 %1295
        %v1297 = vrot.slane %v1296, 2
        %v1299 = vadd.f32 %v1290, %v1297
        %v1300 = vadd.f32 %v1291, %v1297
        %v1301 = vmul.f32 %v1299, 0.5
        %v1302 = vmul.f32 %v1300, 0.5
        %v1303 = vmul.f32 %v1299, 0.70710677
        %v1304 = vmul.f32 %v1300, 0.70710677
        %v1305 = vmul.f32 %v1303, %v1303
        %v1306 = vmin.f32 16.0, %v1305
        %v1307 = vmul.f32 %v1306, 2.1237322e-06
        %v1308 = vadd.f32 %v1307, 0.00028619796
        %v1309 = vmul.f32 %v1306, %v1308
        %v1310 = vadd.f32 %v1309, 0.0036580483
        %v1311 = vmul.f32 %v1306, %v1310
        %v1312 = vadd.f32 %v1311, 0.05243302
        %v1313 = vmul.f32 %v1306, %v1312
        %v1314 = vadd.f32 %v1313, 0.18741608
        %v1315 = vmul.f32 %v1306, %v1314
        %v1316 = vadd.f32 %v1315, 1.1283791
        %v1317 = vmul.f32 %v1303, %v1316
        %v1318 = vmul.f32 %v1306, 3.8918573e-05
        %v1319 = vadd.f32 %v1318, 0.001143296
        %v1320 = vmul.f32 %v1306, %v1319
        %v1321 = vadd.f32 %v1320, 0.014752088
        %v1322 = vmul.f32 %v1306, %v1321
        %v1323 = vadd.f32 %v1322, 0.112945676
        %v1324 = vmul.f32 %v1306, %v1323
        %v1325 = vadd.f32 %v1324, 0.4994258
        %v1326 = vmul.f32 %v1306, %v1325
        %v1327 = vadd.f32 %v1326, 1.0
        %v1328 = vrcp.pop %v1327
        %v1329 = vmul.f32 %v1327, %v1328
        %v1330 = vsub.f32 1.0, %v1329
        %v1331 = vmul.f32 %v1328, %v1330
        %v1332 = vadd.f32 %v1328, %v1331
        %vm1333 = vweird.f32 %v1327
        %vm1334 = vweird.f32 %v1328
        %vm1335 = vmor %vm1333, %vm1334
        %v1336 = vsel %vm1335, %v1328, %v1332
        %v1337 = vand.u32 2147483647, %v1327
        %vm1338 = vcmp.eq.f32.partialorder %v1337, 8.507059e+37
        %v1339 = vand.u32 %v1327, 2147483648
        %v1340 = vor.u32 1.1754944e-38, %v1339
        %v1341 = vsel %vm1338, %v1340, %v1336
        %v1342 = vmul.f32 %v1317, %v1341
        %v1343 = vmin.f32 %v1342, 1.0
        %v1344 = vmax.f32 %v1343, -1.0
        %v1345 = vmul.f32 %v1304, %v1304
        %v1346 = vmin.f32 16.0, %v1345
        %v1347 = vmul.f32 %v1346, 2.1237322e-06
        %v1348 = vadd.f32 %v1347, 0.00028619796
        %v1349 = vmul.f32 %v1346, %v1348
        %v1350 = vadd.f32 %v1349, 0.0036580483
        %v1351 = vmul.f32 %v1346, %v1350
        %v1352 = vadd.f32 %v1351, 0.05243302
        %v1353 = vmul.f32 %v1346, %v1352
        %v1354 = vadd.f32 %v1353, 0.18741608
        %v1355 = vmul.f32 %v1346, %v1354
        %v1356 = vadd.f32 %v1355, 1.1283791
        %v1357 = vmul.f32 %v1304, %v1356
        %v1358 = vmul.f32 %v1346, 3.8918573e-05
        %v1359 = vadd.f32 %v1358, 0.001143296
        %v1360 = vmul.f32 %v1346, %v1359
        %v1361 = vadd.f32 %v1360, 0.014752088
        %v1362 = vmul.f32 %v1346, %v1361
        %v1363 = vadd.f32 %v1362, 0.112945676
        %v1364 = vmul.f32 %v1346, %v1363
        %v1365 = vadd.f32 %v1364, 0.4994258
        %v1366 = vmul.f32 %v1346, %v1365
        %v1367 = vadd.f32 %v1366, 1.0
        %v1368 = vrcp.pop %v1367
        %v1369 = vmul.f32 %v1367, %v1368
        %v1370 = vsub.f32 1.0, %v1369
        %v1371 = vmul.f32 %v1368, %v1370
        %v1372 = vadd.f32 %v1368, %v1371
        %vm1373 = vweird.f32 %v1367
        %vm1374 = vweird.f32 %v1368
        %vm1375 = vmor %vm1373, %vm1374
        %v1376 = vsel %vm1375, %v1368, %v1372
        %v1377 = vand.u32 2147483647, %v1367
        %vm1378 = vcmp.eq.f32.partialorder %v1377, 8.507059e+37
        %v1379 = vand.u32 %v1367, 2147483648
        %v1380 = vor.u32 1.1754944e-38, %v1379
        %v1381 = vsel %vm1378, %v1380, %v1376
        %v1382 = vmul.f32 %v1357, %v1381
        %v1383 = vmin.f32 %v1382, 1.0
        %v1384 = vmax.f32 %v1383, -1.0
        %v1385 = vadd.f32 %v1344, 1.0
        %v1386 = vadd.f32 %v1384, 1.0
        %v1387 = vmul.f32 %v1301, %v1385
        %v1388 = vmul.f32 %v1302, %v1386
        %1389 = vst [vmem:[%s301] sm:$0xc0] %v1387
        %1390 = vst [vmem:[%s301 + $0x8] sm:$0xc0] %v1388
        %v1391 = vld [vmem:[#allocation3 + $0x10] sm:$0x3]
        %v1392 = vld [vmem:[#allocation3 + $0x18] sm:$0x3]
        %v1393 = vsel %vm675, %v1391, 0.0
        %v1394 = vsel %vm675, %v1392, 0.0
        %v1395 = vadd.f32 %v1393, %v1394
        %1396 = vadd.xlane.f32.xlu0 %v1395
        %v1397 = vpop.xlane.xlu0 %1396
        %v1398 = vsel %vm675, %v1397, 0.0
        %v1399 = vrot.slane %v1398, 4
        %v1400 = vadd.f32 %v1398, %v1399
        %v1401 = vrot.slane %v1400, 2
        %v1402 = vadd.f32 %v1400, %v1401
        %v1403 = vrot.slane %v1402, 1
        %v1404 = vadd.f32 %v1402, %v1403
        %v1405 = vmul.f32 %v1404, 0.001953125
        %v1406 = vmul.f32 %v1391, %v1391
        %v1407 = vmul.f32 %v1392, %v1392
        %v1408 = vsel %vm675, %v1406, 0.0
        %v1409 = vsel %vm675, %v1407, 0.0
        %v1410 = vadd.f32 %v1408, %v1409
        %1411 = vadd.xlane.f32.xlu0 %v1410
        %v1412 = vpop.xlane.xlu0 %1411
        %v1413 = vsel %vm675, %v1412, 0.0
        %v1414 = vrot.slane %v1413, 4
        %v1415 = vadd.f32 %v1413, %v1414
        %v1416 = vrot.slane %v1415, 2
        %v1417 = vadd.f32 %v1415, %v1416
        %v1418 = vrot.slane %v1417, 1
        %v1419 = vadd.f32 %v1417, %v1418
        %v1420 = vmul.f32 %v1419, 0.001953125
        %v1421 = vmul.f32 %v1405, %v1405
        %v1422 = vsub.f32 %v1420, %v1421
        %v1423 = vmax.f32 %v1422, 0.0
        %v1424 = vadd.f32 %v1423, 1e-05
        %v1425 = vrsqrt.pop %v1424
        %v1426 = vmul.f32 %v1425, %v1424
        %v1427 = vmul.f32 %v1426, %v1425
        %v1428 = vmul.f32 0.5, %v1427
        %v1429 = vsub.f32 1.5, %v1428
        %v1430 = vmul.f32 %v1425, %v1429
        %vm1431 = vweird.f32 %v1424
        %vm1432 = vweird.f32 %v1425
        %vm1433 = vmor %vm1431, %vm1432
        %v1434 = vsel %vm1433, %v1425, %v1430
        %v1435 = vsub.f32 %v1391, %v1405
        %v1436 = vsub.f32 %v1392, %v1405
        %v1437 = vmul.f32 %v1435, %v1434
        %v1438 = vmul.f32 %v1436, %v1434
        %v1439 = vld [vmem:[%s3 + $0x8] sm:$0x3]
        %1441 = vset.pattern.permute.xlu0 0
        %1442 = vperm.xlu0 %1441, %v1439
        %v1443 = vpop.permute.xlu0 %1442
        %v1445 = vmul.f32 %v1437, %v1443
        %v1446 = vmul.f32 %v1438, %v1443
        %v1447 = vld [vmem:[%s4 + $0x8] sm:$0x3]
        %1449 = vset.pattern.permute.xlu0 0
        %1450 = vperm.xlu0 %1449, %v1447
        %v1451 = vpop.permute.xlu0 %1450
        %v1453 = vadd.f32 %v1445, %v1451
        %v1454 = vadd.f32 %v1446, %v1451
        %v1455 = vld [vmem:[%s311 + $0x8] sm:$0x3]
        %v1456 = vadd.f32 %v1455, 1.0
        %1458 = vset.pattern.permute.xlu0 0
        %1459 = vperm.xlu0 %1458, %v1456
        %v1460 = vpop.permute.xlu0 %1459
        %v1462 = vmul.f32 %v1453, %v1460
        %v1463 = vmul.f32 %v1454, %v1460
        %v1464 = vld [vmem:[%s316 + $0x8] sm:$0x3]
        %1466 = vset.pattern.permute.xlu0 0
        %1467 = vperm.xlu0 %1466, %v1464
        %v1468 = vpop.permute.xlu0 %1467
        %v1470 = vadd.f32 %v1462, %v1468
        %v1471 = vadd.f32 %v1463, %v1468
        %v1472 = vmul.f32 %v1470, 0.5
        %v1473 = vmul.f32 %v1471, 0.5
        %v1474 = vmul.f32 %v1470, 0.70710677
        %v1475 = vmul.f32 %v1471, 0.70710677
        %v1476 = vmul.f32 %v1474, %v1474
        %v1477 = vmin.f32 16.0, %v1476
        %v1478 = vmul.f32 %v1477, 2.1237322e-06
        %v1479 = vadd.f32 %v1478, 0.00028619796
        %v1480 = vmul.f32 %v1477, %v1479
        %v1481 = vadd.f32 %v1480, 0.0036580483
        %v1482 = vmul.f32 %v1477, %v1481
        %v1483 = vadd.f32 %v1482, 0.05243302
        %v1484 = vmul.f32 %v1477, %v1483
        %v1485 = vadd.f32 %v1484, 0.18741608
        %v1486 = vmul.f32 %v1477, %v1485
        %v1487 = vadd.f32 %v1486, 1.1283791
        %v1488 = vmul.f32 %v1474, %v1487
        %v1489 = vmul.f32 %v1477, 3.8918573e-05
        %v1490 = vadd.f32 %v1489, 0.001143296
        %v1491 = vmul.f32 %v1477, %v1490
        %v1492 = vadd.f32 %v1491, 0.014752088
        %v1493 = vmul.f32 %v1477, %v1492
        %v1494 = vadd.f32 %v1493, 0.112945676
        %v1495 = vmul.f32 %v1477, %v1494
        %v1496 = vadd.f32 %v1495, 0.4994258
        %v1497 = vmul.f32 %v1477, %v1496
        %v1498 = vadd.f32 %v1497, 1.0
        %v1499 = vrcp.pop %v1498
        %v1500 = vmul.f32 %v1498, %v1499
        %v1501 = vsub.f32 1.0, %v1500
        %v1502 = vmul.f32 %v1499, %v1501
        %v1503 = vadd.f32 %v1499, %v1502
        %vm1504 = vweird.f32 %v1498
        %vm1505 = vweird.f32 %v1499
        %vm1506 = vmor %vm1504, %vm1505
        %v1507 = vsel %vm1506, %v1499, %v1503
        %v1508 = vand.u32 2147483647, %v1498
        %vm1509 = vcmp.eq.f32.partialorder %v1508, 8.507059e+37
        %v1510 = vand.u32 %v1498, 2147483648
        %v1511 = vor.u32 1.1754944e-38, %v1510
        %v1512 = vsel %vm1509, %v1511, %v1507
        %v1513 = vmul.f32 %v1488, %v1512
        %v1514 = vmin.f32 %v1513, 1.0
        %v1515 = vmax.f32 %v1514, -1.0
        %v1516 = vmul.f32 %v1475, %v1475
        %v1517 = vmin.f32 16.0, %v1516
        %v1518 = vmul.f32 %v1517, 2.1237322e-06
        %v1519 = vadd.f32 %v1518, 0.00028619796
        %v1520 = vmul.f32 %v1517, %v1519
        %v1521 = vadd.f32 %v1520, 0.0036580483
        %v1522 = vmul.f32 %v1517, %v1521
        %v1523 = vadd.f32 %v1522, 0.05243302
        %v1524 = vmul.f32 %v1517, %v1523
        %v1525 = vadd.f32 %v1524, 0.18741608
        %v1526 = vmul.f32 %v1517, %v1525
        %v1527 = vadd.f32 %v1526, 1.1283791
        %v1528 = vmul.f32 %v1475, %v1527
        %v1529 = vmul.f32 %v1517, 3.8918573e-05
        %v1530 = vadd.f32 %v1529, 0.001143296
        %v1531 = vmul.f32 %v1517, %v1530
        %v1532 = vadd.f32 %v1531, 0.014752088
        %v1533 = vmul.f32 %v1517, %v1532
        %v1534 = vadd.f32 %v1533, 0.112945676
        %v1535 = vmul.f32 %v1517, %v1534
        %v1536 = vadd.f32 %v1535, 0.4994258
        %v1537 = vmul.f32 %v1517, %v1536
        %v1538 = vadd.f32 %v1537, 1.0
        %v1539 = vrcp.pop %v1538
        %v1540 = vmul.f32 %v1538, %v1539
        %v1541 = vsub.f32 1.0, %v1540
        %v1542 = vmul.f32 %v1539, %v1541
        %v1543 = vadd.f32 %v1539, %v1542
        %vm1544 = vweird.f32 %v1538
        %vm1545 = vweird.f32 %v1539
        %vm1546 = vmor %vm1544, %vm1545
        %v1547 = vsel %vm1546, %v1539, %v1543
        %v1548 = vand.u32 2147483647, %v1538
        %vm1549 = vcmp.eq.f32.partialorder %v1548, 8.507059e+37
        %v1550 = vand.u32 %v1538, 2147483648
        %v1551 = vor.u32 1.1754944e-38, %v1550
        %v1552 = vsel %vm1549, %v1551, %v1547
        %v1553 = vmul.f32 %v1528, %v1552
        %v1554 = vmin.f32 %v1553, 1.0
        %v1555 = vmax.f32 %v1554, -1.0
        %v1556 = vadd.f32 %v1515, 1.0
        %v1557 = vadd.f32 %v1555, 1.0
        %v1558 = vmul.f32 %v1472, %v1556
        %v1559 = vmul.f32 %v1473, %v1557
        %1560 = vst [vmem:[%s301 + $0x10] sm:$0x3] %v1558
        %1561 = vst [vmem:[%s301 + $0x18] sm:$0x3] %v1559
        %v1562 = vld [vmem:[#allocation3 + $0x10] sm:$0xc]
        %v1563 = vld [vmem:[#allocation3 + $0x18] sm:$0xc]
        %v1564 = vsel %vm847, %v1562, 0.0
        %v1565 = vsel %vm847, %v1563, 0.0
        %v1566 = vadd.f32 %v1564, %v1565
        %1567 = vadd.xlane.f32.xlu0 %v1566
        %v1568 = vpop.xlane.xlu0 %1567
        %v1570 = vrot.slane %v1568, 2
        %v1572 = vsel %vm675, %v1570, 0.0
        %v1573 = vrot.slane %v1572, 4
        %v1574 = vadd.f32 %v1572, %v1573
        %v1575 = vrot.slane %v1574, 2
        %v1576 = vadd.f32 %v1574, %v1575
        %v1577 = vrot.slane %v1576, 1
        %v1578 = vadd.f32 %v1576, %v1577
        %v1579 = vmul.f32 %v1578, 0.001953125
        %v1580 = vmul.f32 %v1562, %v1562
        %v1581 = vmul.f32 %v1563, %v1563
        %v1582 = vsel %vm847, %v1580, 0.0
        %v1583 = vsel %vm847, %v1581, 0.0
        %v1584 = vadd.f32 %v1582, %v1583
        %1585 = vadd.xlane.f32.xlu0 %v1584
        %v1586 = vpop.xlane.xlu0 %1585
        %v1588 = vrot.slane %v1586, 2
        %v1590 = vsel %vm675, %v1588, 0.0
        %v1591 = vrot.slane %v1590, 4
        %v1592 = vadd.f32 %v1590, %v1591
        %v1593 = vrot.slane %v1592, 2
        %v1594 = vadd.f32 %v1592, %v1593
        %v1595 = vrot.slane %v1594, 1
        %v1596 = vadd.f32 %v1594, %v1595
        %v1597 = vmul.f32 %v1596, 0.001953125
        %v1598 = vmul.f32 %v1579, %v1579
        %v1599 = vsub.f32 %v1597, %v1598
        %v1600 = vmax.f32 %v1599, 0.0
        %v1601 = vadd.f32 %v1600, 1e-05
        %v1602 = vrsqrt.pop %v1601
        %v1603 = vmul.f32 %v1602, %v1601
        %v1604 = vmul.f32 %v1603, %v1602
        %v1605 = vmul.f32 0.5, %v1604
        %v1606 = vsub.f32 1.5, %v1605
        %v1607 = vmul.f32 %v1602, %v1606
        %vm1608 = vweird.f32 %v1601
        %vm1609 = vweird.f32 %v1602
        %vm1610 = vmor %vm1608, %vm1609
        %v1611 = vsel %vm1610, %v1602, %v1607
        %v1612 = vsub.f32 %v1562, %v1579
        %v1613 = vsub.f32 %v1563, %v1579
        %v1614 = vmul.f32 %v1612, %v1611
        %v1615 = vmul.f32 %v1613, %v1611
        %v1616 = vld [vmem:[%s3 + $0xa] sm:$0x3]
        %1618 = vset.pattern.permute.xlu0 0
        %1619 = vperm.xlu0 %1618, %v1616
        %v1620 = vpop.permute.xlu0 %1619
        %v1621 = vrot.slane %v1620, 6
        %v1623 = vmul.f32 %v1614, %v1621
        %v1624 = vmul.f32 %v1615, %v1621
        %v1625 = vld [vmem:[%s4 + $0xa] sm:$0x3]
        %1627 = vset.pattern.permute.xlu0 0
        %1628 = vperm.xlu0 %1627, %v1625
        %v1629 = vpop.permute.xlu0 %1628
        %v1630 = vrot.slane %v1629, 6
        %v1632 = vadd.f32 %v1623, %v1630
        %v1633 = vadd.f32 %v1624, %v1630
        %v1634 = vld [vmem:[%s311 + $0xa] sm:$0x3]
        %v1635 = vadd.f32 %v1634, 1.0
        %1637 = vset.pattern.permute.xlu0 0
        %1638 = vperm.xlu0 %1637, %v1635
        %v1639 = vpop.permute.xlu0 %1638
        %v1640 = vrot.slane %v1639, 6
        %v1642 = vmul.f32 %v1632, %v1640
        %v1643 = vmul.f32 %v1633, %v1640
        %v1644 = vld [vmem:[%s316 + $0xa] sm:$0x3]
        %1646 = vset.pattern.permute.xlu0 0
        %1647 = vperm.xlu0 %1646, %v1644
        %v1648 = vpop.permute.xlu0 %1647
        %v1649 = vrot.slane %v1648, 6
        %v1651 = vadd.f32 %v1642, %v1649
        %v1652 = vadd.f32 %v1643, %v1649
        %v1653 = vmul.f32 %v1651, 0.5
        %v1654 = vmul.f32 %v1652, 0.5
        %v1655 = vmul.f32 %v1651, 0.70710677
        %v1656 = vmul.f32 %v1652, 0.70710677
        %v1657 = vmul.f32 %v1655, %v1655
        %v1658 = vmin.f32 16.0, %v1657
        %v1659 = vmul.f32 %v1658, 2.1237322e-06
        %v1660 = vadd.f32 %v1659, 0.00028619796
        %v1661 = vmul.f32 %v1658, %v1660
        %v1662 = vadd.f32 %v1661, 0.0036580483
        %v1663 = vmul.f32 %v1658, %v1662
        %v1664 = vadd.f32 %v1663, 0.05243302
        %v1665 = vmul.f32 %v1658, %v1664
        %v1666 = vadd.f32 %v1665, 0.18741608
        %v1667 = vmul.f32 %v1658, %v1666
        %v1668 = vadd.f32 %v1667, 1.1283791
        %v1669 = vmul.f32 %v1655, %v1668
        %v1670 = vmul.f32 %v1658, 3.8918573e-05
        %v1671 = vadd.f32 %v1670, 0.001143296
        %v1672 = vmul.f32 %v1658, %v1671
        %v1673 = vadd.f32 %v1672, 0.014752088
        %v1674 = vmul.f32 %v1658, %v1673
        %v1675 = vadd.f32 %v1674, 0.112945676
        %v1676 = vmul.f32 %v1658, %v1675
        %v1677 = vadd.f32 %v1676, 0.4994258
        %v1678 = vmul.f32 %v1658, %v1677
        %v1679 = vadd.f32 %v1678, 1.0
        %v1680 = vrcp.pop %v1679
        %v1681 = vmul.f32 %v1679, %v1680
        %v1682 = vsub.f32 1.0, %v1681
        %v1683 = vmul.f32 %v1680, %v1682
        %v1684 = vadd.f32 %v1680, %v1683
        %vm1685 = vweird.f32 %v1679
        %vm1686 = vweird.f32 %v1680
        %vm1687 = vmor %vm1685, %vm1686
        %v1688 = vsel %vm1687, %v1680, %v1684
        %v1689 = vand.u32 2147483647, %v1679
        %vm1690 = vcmp.eq.f32.partialorder %v1689, 8.507059e+37
        %v1691 = vand.u32 %v1679, 2147483648
        %v1692 = vor.u32 1.1754944e-38, %v1691
        %v1693 = vsel %vm1690, %v1692, %v1688
        %v1694 = vmul.f32 %v1669, %v1693
        %v1695 = vmin.f32 %v1694, 1.0
        %v1696 = vmax.f32 %v1695, -1.0
        %v1697 = vmul.f32 %v1656, %v1656
        %v1698 = vmin.f32 16.0, %v1697
        %v1699 = vmul.f32 %v1698, 2.1237322e-06
        %v1700 = vadd.f32 %v1699, 0.00028619796
        %v1701 = vmul.f32 %v1698, %v1700
        %v1702 = vadd.f32 %v1701, 0.0036580483
        %v1703 = vmul.f32 %v1698, %v1702
        %v1704 = vadd.f32 %v1703, 0.05243302
        %v1705 = vmul.f32 %v1698, %v1704
        %v1706 = vadd.f32 %v1705, 0.18741608
        %v1707 = vmul.f32 %v1698, %v1706
        %v1708 = vadd.f32 %v1707, 1.1283791
        %v1709 = vmul.f32 %v1656, %v1708
        %v1710 = vmul.f32 %v1698, 3.8918573e-05
        %v1711 = vadd.f32 %v1710, 0.001143296
        %v1712 = vmul.f32 %v1698, %v1711
        %v1713 = vadd.f32 %v1712, 0.014752088
        %v1714 = vmul.f32 %v1698, %v1713
        %v1715 = vadd.f32 %v1714, 0.112945676
        %v1716 = vmul.f32 %v1698, %v1715
        %v1717 = vadd.f32 %v1716, 0.4994258
        %v1718 = vmul.f32 %v1698, %v1717
        %v1719 = vadd.f32 %v1718, 1.0
        %v1720 = vrcp.pop %v1719
        %v1721 = vmul.f32 %v1719, %v1720
        %v1722 = vsub.f32 1.0, %v1721
        %v1723 = vmul.f32 %v1720, %v1722
        %v1724 = vadd.f32 %v1720, %v1723
        %vm1725 = vweird.f32 %v1719
        %vm1726 = vweird.f32 %v1720
        %vm1727 = vmor %vm1725, %vm1726
        %v1728 = vsel %vm1727, %v1720, %v1724
        %v1729 = vand.u32 2147483647, %v1719
        %vm1730 = vcmp.eq.f32.partialorder %v1729, 8.507059e+37
        %v1731 = vand.u32 %v1719, 2147483648
        %v1732 = vor.u32 1.1754944e-38, %v1731
        %v1733 = vsel %vm1730, %v1732, %v1728
        %v1734 = vmul.f32 %v1709, %v1733
        %v1735 = vmin.f32 %v1734, 1.0
        %v1736 = vmax.f32 %v1735, -1.0
        %v1737 = vadd.f32 %v1696, 1.0
        %v1738 = vadd.f32 %v1736, 1.0
        %v1739 = vmul.f32 %v1653, %v1737
        %v1740 = vmul.f32 %v1654, %v1738
        %1741 = vst [vmem:[%s301 + $0x10] sm:$0xc] %v1739
        %1742 = vst [vmem:[%s301 + $0x18] sm:$0xc] %v1740
        %v1743 = vld [vmem:[#allocation3 + $0x10] sm:$0x30]
        %v1744 = vld [vmem:[#allocation3 + $0x18] sm:$0x30]
        %v1745 = vsel %vm1029, %v1743, 0.0
        %v1746 = vsel %vm1029, %v1744, 0.0
        %v1747 = vadd.f32 %v1745, %v1746
        %1748 = vadd.xlane.f32.xlu0 %v1747
        %v1749 = vpop.xlane.xlu0 %1748
        %v1751 = vrot.slane %v1749, 4
        %v1753 = vsel %vm675, %v1751, 0.0
        %v1754 = vrot.slane %v1753, 4
        %v1755 = vadd.f32 %v1753, %v1754
        %v1756 = vrot.slane %v1755, 2
        %v1757 = vadd.f32 %v1755, %v1756
        %v1758 = vrot.slane %v1757, 1
        %v1759 = vadd.f32 %v1757, %v1758
        %v1760 = vmul.f32 %v1759, 0.001953125
        %v1761 = vmul.f32 %v1743, %v1743
        %v1762 = vmul.f32 %v1744, %v1744
        %v1763 = vsel %vm1029, %v1761, 0.0
        %v1764 = vsel %vm1029, %v1762, 0.0
        %v1765 = vadd.f32 %v1763, %v1764
        %1766 = vadd.xlane.f32.xlu0 %v1765
        %v1767 = vpop.xlane.xlu0 %1766
        %v1769 = vrot.slane %v1767, 4
        %v1771 = vsel %vm675, %v1769, 0.0
        %v1772 = vrot.slane %v1771, 4
        %v1773 = vadd.f32 %v1771, %v1772
        %v1774 = vrot.slane %v1773, 2
        %v1775 = vadd.f32 %v1773, %v1774
        %v1776 = vrot.slane %v1775, 1
        %v1777 = vadd.f32 %v1775, %v1776
        %v1778 = vmul.f32 %v1777, 0.001953125
        %v1779 = vmul.f32 %v1760, %v1760
        %v1780 = vsub.f32 %v1778, %v1779
        %v1781 = vmax.f32 %v1780, 0.0
        %v1782 = vadd.f32 %v1781, 1e-05
        %v1783 = vrsqrt.pop %v1782
        %v1784 = vmul.f32 %v1783, %v1782
        %v1785 = vmul.f32 %v1784, %v1783
        %v1786 = vmul.f32 0.5, %v1785
        %v1787 = vsub.f32 1.5, %v1786
        %v1788 = vmul.f32 %v1783, %v1787
        %vm1789 = vweird.f32 %v1782
        %vm1790 = vweird.f32 %v1783
        %vm1791 = vmor %vm1789, %vm1790
        %v1792 = vsel %vm1791, %v1783, %v1788
        %v1793 = vsub.f32 %v1743, %v1760
        %v1794 = vsub.f32 %v1744, %v1760
        %v1795 = vmul.f32 %v1793, %v1792
        %v1796 = vmul.f32 %v1794, %v1792
        %v1797 = vld [vmem:[%s3 + $0xc] sm:$0x3]
        %1799 = vset.pattern.permute.xlu0 0
        %1800 = vperm.xlu0 %1799, %v1797
        %v1801 = vpop.permute.xlu0 %1800
        %v1802 = vrot.slane %v1801, 4
        %v1804 = vmul.f32 %v1795, %v1802
        %v1805 = vmul.f32 %v1796, %v1802
        %v1806 = vld [vmem:[%s4 + $0xc] sm:$0x3]
        %1808 = vset.pattern.permute.xlu0 0
        %1809 = vperm.xlu0 %1808, %v1806
        %v1810 = vpop.permute.xlu0 %1809
        %v1811 = vrot.slane %v1810, 4
        %v1813 = vadd.f32 %v1804, %v1811
        %v1814 = vadd.f32 %v1805, %v1811
        %v1815 = vld [vmem:[%s311 + $0xc] sm:$0x3]
        %v1816 = vadd.f32 %v1815, 1.0
        %1818 = vset.pattern.permute.xlu0 0
        %1819 = vperm.xlu0 %1818, %v1816
        %v1820 = vpop.permute.xlu0 %1819
        %v1821 = vrot.slane %v1820, 4
        %v1823 = vmul.f32 %v1813, %v1821
        %v1824 = vmul.f32 %v1814, %v1821
        %v1825 = vld [vmem:[%s316 + $0xc] sm:$0x3]
        %1827 = vset.pattern.permute.xlu0 0
        %1828 = vperm.xlu0 %1827, %v1825
        %v1829 = vpop.permute.xlu0 %1828
        %v1830 = vrot.slane %v1829, 4
        %v1832 = vadd.f32 %v1823, %v1830
        %v1833 = vadd.f32 %v1824, %v1830
        %v1834 = vmul.f32 %v1832, 0.5
        %v1835 = vmul.f32 %v1833, 0.5
        %v1836 = vmul.f32 %v1832, 0.70710677
        %v1837 = vmul.f32 %v1833, 0.70710677
        %v1838 = vmul.f32 %v1836, %v1836
        %v1839 = vmin.f32 16.0, %v1838
        %v1840 = vmul.f32 %v1839, 2.1237322e-06
        %v1841 = vadd.f32 %v1840, 0.00028619796
        %v1842 = vmul.f32 %v1839, %v1841
        %v1843 = vadd.f32 %v1842, 0.0036580483
        %v1844 = vmul.f32 %v1839, %v1843
        %v1845 = vadd.f32 %v1844, 0.05243302
        %v1846 = vmul.f32 %v1839, %v1845
        %v1847 = vadd.f32 %v1846, 0.18741608
        %v1848 = vmul.f32 %v1839, %v1847
        %v1849 = vadd.f32 %v1848, 1.1283791
        %v1850 = vmul.f32 %v1836, %v1849
        %v1851 = vmul.f32 %v1839, 3.8918573e-05
        %v1852 = vadd.f32 %v1851, 0.001143296
        %v1853 = vmul.f32 %v1839, %v1852
        %v1854 = vadd.f32 %v1853, 0.014752088
        %v1855 = vmul.f32 %v1839, %v1854
        %v1856 = vadd.f32 %v1855, 0.112945676
        %v1857 = vmul.f32 %v1839, %v1856
        %v1858 = vadd.f32 %v1857, 0.4994258
        %v1859 = vmul.f32 %v1839, %v1858
        %v1860 = vadd.f32 %v1859, 1.0
        %v1861 = vrcp.pop %v1860
        %v1862 = vmul.f32 %v1860, %v1861
        %v1863 = vsub.f32 1.0, %v1862
        %v1864 = vmul.f32 %v1861, %v1863
        %v1865 = vadd.f32 %v1861, %v1864
        %vm1866 = vweird.f32 %v1860
        %vm1867 = vweird.f32 %v1861
        %vm1868 = vmor %vm1866, %vm1867
        %v1869 = vsel %vm1868, %v1861, %v1865
        %v1870 = vand.u32 2147483647, %v1860
        %vm1871 = vcmp.eq.f32.partialorder %v1870, 8.507059e+37
        %v1872 = vand.u32 %v1860, 2147483648
        %v1873 = vor.u32 1.1754944e-38, %v1872
        %v1874 = vsel %vm1871, %v1873, %v1869
        %v1875 = vmul.f32 %v1850, %v1874
        %v1876 = vmin.f32 %v1875, 1.0
        %v1877 = vmax.f32 %v1876, -1.0
        %v1878 = vmul.f32 %v1837, %v1837
        %v1879 = vmin.f32 16.0, %v1878
        %v1880 = vmul.f32 %v1879, 2.1237322e-06
        %v1881 = vadd.f32 %v1880, 0.00028619796
        %v1882 = vmul.f32 %v1879, %v1881
        %v1883 = vadd.f32 %v1882, 0.0036580483
        %v1884 = vmul.f32 %v1879, %v1883
        %v1885 = vadd.f32 %v1884, 0.05243302
        %v1886 = vmul.f32 %v1879, %v1885
        %v1887 = vadd.f32 %v1886, 0.18741608
        %v1888 = vmul.f32 %v1879, %v1887
        %v1889 = vadd.f32 %v1888, 1.1283791
        %v1890 = vmul.f32 %v1837, %v1889
        %v1891 = vmul.f32 %v1879, 3.8918573e-05
        %v1892 = vadd.f32 %v1891, 0.001143296
        %v1893 = vmul.f32 %v1879, %v1892
        %v1894 = vadd.f32 %v1893, 0.014752088
        %v1895 = vmul.f32 %v1879, %v1894
        %v1896 = vadd.f32 %v1895, 0.112945676
        %v1897 = vmul.f32 %v1879, %v1896
        %v1898 = vadd.f32 %v1897, 0.4994258
        %v1899 = vmul.f32 %v1879, %v1898
        %v1900 = vadd.f32 %v1899, 1.0
        %v1901 = vrcp.pop %v1900
        %v1902 = vmul.f32 %v1900, %v1901
        %v1903 = vsub.f32 1.0, %v1902
        %v1904 = vmul.f32 %v1901, %v1903
        %v1905 = vadd.f32 %v1901, %v1904
        %vm1906 = vweird.f32 %v1900
        %vm1907 = vweird.f32 %v1901
        %vm1908 = vmor %vm1906, %vm1907
        %v1909 = vsel %vm1908, %v1901, %v1905
        %v1910 = vand.u32 2147483647, %v1900
        %vm1911 = vcmp.eq.f32.partialorder %v1910, 8.507059e+37
        %v1912 = vand.u32 %v1900, 2147483648
        %v1913 = vor.u32 1.1754944e-38, %v1912
        %v1914 = vsel %vm1911, %v1913, %v1909
        %v1915 = vmul.f32 %v1890, %v1914
        %v1916 = vmin.f32 %v1915, 1.0
        %v1917 = vmax.f32 %v1916, -1.0
        %v1918 = vadd.f32 %v1877, 1.0
        %v1919 = vadd.f32 %v1917, 1.0
        %v1920 = vmul.f32 %v1834, %v1918
        %v1921 = vmul.f32 %v1835, %v1919
        %1922 = vst [vmem:[%s301 + $0x10] sm:$0x30] %v1920
        %1923 = vst [vmem:[%s301 + $0x18] sm:$0x30] %v1921
        %v1924 = vld [vmem:[#allocation3 + $0x10] sm:$0xc0]
        %v1925 = vld [vmem:[#allocation3 + $0x18] sm:$0xc0]
        %v1926 = vsel %vm1211, %v1924, 0.0
        %v1927 = vsel %vm1211, %v1925, 0.0
        %v1928 = vadd.f32 %v1926, %v1927
        %1929 = vadd.xlane.f32.xlu0 %v1928
        %v1930 = vpop.xlane.xlu0 %1929
        %v1932 = vrot.slane %v1930, 6
        %v1934 = vsel %vm675, %v1932, 0.0
        %v1935 = vrot.slane %v1934, 4
        %v1936 = vadd.f32 %v1934, %v1935
        %v1937 = vrot.slane %v1936, 2
        %v1938 = vadd.f32 %v1936, %v1937
        %v1939 = vrot.slane %v1938, 1
        %v1940 = vadd.f32 %v1938, %v1939
        %v1941 = vmul.f32 %v1940, 0.001953125
        %v1942 = vmul.f32 %v1924, %v1924
        %v1943 = vmul.f32 %v1925, %v1925
        %v1944 = vsel %vm1211, %v1942, 0.0
        %v1945 = vsel %vm1211, %v1943, 0.0
        %v1946 = vadd.f32 %v1944, %v1945
        %1947 = vadd.xlane.f32.xlu0 %v1946
        %v1948 = vpop.xlane.xlu0 %1947
        %v1950 = vrot.slane %v1948, 6
        %v1952 = vsel %vm675, %v1950, 0.0
        %v1953 = vrot.slane %v1952, 4
        %v1954 = vadd.f32 %v1952, %v1953
        %v1955 = vrot.slane %v1954, 2
        %v1956 = vadd.f32 %v1954, %v1955
        %v1957 = vrot.slane %v1956, 1
        %v1958 = vadd.f32 %v1956, %v1957
        %v1959 = vmul.f32 %v1958, 0.001953125
        %v1960 = vmul.f32 %v1941, %v1941
        %v1961 = vsub.f32 %v1959, %v1960
        %v1962 = vmax.f32 %v1961, 0.0
        %v1963 = vadd.f32 %v1962, 1e-05
        %v1964 = vrsqrt.pop %v1963
        %v1965 = vmul.f32 %v1964, %v1963
        %v1966 = vmul.f32 %v1965, %v1964
        %v1967 = vmul.f32 0.5, %v1966
        %v1968 = vsub.f32 1.5, %v1967
        %v1969 = vmul.f32 %v1964, %v1968
        %vm1970 = vweird.f32 %v1963
        %vm1971 = vweird.f32 %v1964
        %vm1972 = vmor %vm1970, %vm1971
        %v1973 = vsel %vm1972, %v1964, %v1969
        %v1974 = vsub.f32 %v1924, %v1941
        %v1975 = vsub.f32 %v1925, %v1941
        %v1976 = vmul.f32 %v1974, %v1973
        %v1977 = vmul.f32 %v1975, %v1973
        %v1978 = vld [vmem:[%s3 + $0xe] sm:$0x3]
        %1980 = vset.pattern.permute.xlu0 0
        %1981 = vperm.xlu0 %1980, %v1978
        %v1982 = vpop.permute.xlu0 %1981
        %v1983 = vrot.slane %v1982, 2
        %v1985 = vmul.f32 %v1976, %v1983
        %v1986 = vmul.f32 %v1977, %v1983
        %v1987 = vld [vmem:[%s4 + $0xe] sm:$0x3]
        %1989 = vset.pattern.permute.xlu0 0
        %1990 = vperm.xlu0 %1989, %v1987
        %v1991 = vpop.permute.xlu0 %1990
        %v1992 = vrot.slane %v1991, 2
        %v1994 = vadd.f32 %v1985, %v1992
        %v1995 = vadd.f32 %v1986, %v1992
        %v1996 = vld [vmem:[%s311 + $0xe] sm:$0x3]
        %v1997 = vadd.f32 %v1996, 1.0
        %1999 = vset.pattern.permute.xlu0 0
        %2000 = vperm.xlu0 %1999, %v1997
        %v2001 = vpop.permute.xlu0 %2000
        %v2002 = vrot.slane %v2001, 2
        %v2004 = vmul.f32 %v1994, %v2002
        %v2005 = vmul.f32 %v1995, %v2002
        %v2006 = vld [vmem:[%s316 + $0xe] sm:$0x3]
        %2008 = vset.pattern.permute.xlu0 0
        %2009 = vperm.xlu0 %2008, %v2006
        %v2010 = vpop.permute.xlu0 %2009
        %v2011 = vrot.slane %v2010, 2
        %v2013 = vadd.f32 %v2004, %v2011
        %v2014 = vadd.f32 %v2005, %v2011
        %v2015 = vmul.f32 %v2013, 0.5
        %v2016 = vmul.f32 %v2014, 0.5
        %v2017 = vmul.f32 %v2013, 0.70710677
        %v2018 = vmul.f32 %v2014, 0.70710677
        %v2019 = vmul.f32 %v2017, %v2017
        %v2020 = vmin.f32 16.0, %v2019
        %v2021 = vmul.f32 %v2020, 2.1237322e-06
        %v2022 = vadd.f32 %v2021, 0.00028619796
        %v2023 = vmul.f32 %v2020, %v2022
        %v2024 = vadd.f32 %v2023, 0.0036580483
        %v2025 = vmul.f32 %v2020, %v2024
        %v2026 = vadd.f32 %v2025, 0.05243302
        %v2027 = vmul.f32 %v2020, %v2026
        %v2028 = vadd.f32 %v2027, 0.18741608
        %v2029 = vmul.f32 %v2020, %v2028
        %v2030 = vadd.f32 %v2029, 1.1283791
        %v2031 = vmul.f32 %v2017, %v2030
        %v2032 = vmul.f32 %v2020, 3.8918573e-05
        %v2033 = vadd.f32 %v2032, 0.001143296
        %v2034 = vmul.f32 %v2020, %v2033
        %v2035 = vadd.f32 %v2034, 0.014752088
        %v2036 = vmul.f32 %v2020, %v2035
        %v2037 = vadd.f32 %v2036, 0.112945676
        %v2038 = vmul.f32 %v2020, %v2037
        %v2039 = vadd.f32 %v2038, 0.4994258
        %v2040 = vmul.f32 %v2020, %v2039
        %v2041 = vadd.f32 %v2040, 1.0
        %v2042 = vrcp.pop %v2041
        %v2043 = vmul.f32 %v2041, %v2042
        %v2044 = vsub.f32 1.0, %v2043
        %v2045 = vmul.f32 %v2042, %v2044
        %v2046 = vadd.f32 %v2042, %v2045
        %vm2047 = vweird.f32 %v2041
        %vm2048 = vweird.f32 %v2042
        %vm2049 = vmor %vm2047, %vm2048
        %v2050 = vsel %vm2049, %v2042, %v2046
        %v2051 = vand.u32 2147483647, %v2041
        %vm2052 = vcmp.eq.f32.partialorder %v2051, 8.507059e+37
        %v2053 = vand.u32 %v2041, 2147483648
        %v2054 = vor.u32 1.1754944e-38, %v2053
        %v2055 = vsel %vm2052, %v2054, %v2050
        %v2056 = vmul.f32 %v2031, %v2055
        %v2057 = vmin.f32 %v2056, 1.0
        %v2058 = vmax.f32 %v2057, -1.0
        %v2059 = vmul.f32 %v2018, %v2018
        %v2060 = vmin.f32 16.0, %v2059
        %v2061 = vmul.f32 %v2060, 2.1237322e-06
        %v2062 = vadd.f32 %v2061, 0.00028619796
        %v2063 = vmul.f32 %v2060, %v2062
        %v2064 = vadd.f32 %v2063, 0.0036580483
        %v2065 = vmul.f32 %v2060, %v2064
        %v2066 = vadd.f32 %v2065, 0.05243302
        %v2067 = vmul.f32 %v2060, %v2066
        %v2068 = vadd.f32 %v2067, 0.18741608
        %v2069 = vmul.f32 %v2060, %v2068
        %v2070 = vadd.f32 %v2069, 1.1283791
        %v2071 = vmul.f32 %v2018, %v2070
        %v2072 = vmul.f32 %v2060, 3.8918573e-05
        %v2073 = vadd.f32 %v2072, 0.001143296
        %v2074 = vmul.f32 %v2060, %v2073
        %v2075 = vadd.f32 %v2074, 0.014752088
        %v2076 = vmul.f32 %v2060, %v2075
        %v2077 = vadd.f32 %v2076, 0.112945676
        %v2078 = vmul.f32 %v2060, %v2077
        %v2079 = vadd.f32 %v2078, 0.4994258
        %v2080 = vmul.f32 %v2060, %v2079
        %v2081 = vadd.f32 %v2080, 1.0
        %v2082 = vrcp.pop %v2081
        %v2083 = vmul.f32 %v2081, %v2082
        %v2084 = vsub.f32 1.0, %v2083
        %v2085 = vmul.f32 %v2082, %v2084
        %v2086 = vadd.f32 %v2082, %v2085
        %vm2087 = vweird.f32 %v2081
        %vm2088 = vweird.f32 %v2082
        %vm2089 = vmor %vm2087, %vm2088
        %v2090 = vsel %vm2089, %v2082, %v2086
        %v2091 = vand.u32 2147483647, %v2081
        %vm2092 = vcmp.eq.f32.partialorder %v2091, 8.507059e+37
        %v2093 = vand.u32 %v2081, 2147483648
        %v2094 = vor.u32 1.1754944e-38, %v2093
        %v2095 = vsel %vm2092, %v2094, %v2090
        %v2096 = vmul.f32 %v2071, %v2095
        %v2097 = vmin.f32 %v2096, 1.0
        %v2098 = vmax.f32 %v2097, -1.0
        %v2099 = vadd.f32 %v2058, 1.0
        %v2100 = vadd.f32 %v2098, 1.0
        %v2101 = vmul.f32 %v2015, %v2099
        %v2102 = vmul.f32 %v2016, %v2100
        %2103 = vst [vmem:[%s301 + $0x10] sm:$0xc0] %v2101
        %2104 = vst [vmem:[%s301 + $0x18] sm:$0xc0] %v2102
        %s2105 = sand.u32 %s191, 1
        %s2106 = scalar_lea.sflag [#allocation5], %s2105
        %s2107 = sand.u32 %s191, 1
        %s2108 = smul.addr %s2107, 32
        %s2109 = scalar_lea.vmem [#allocation4], %s2108
        // Predicated region
        $region49: #{tpu_custom_call.1} parent=47 // pred_check
          %p2110 = pneg %p201
        $region50: #{tpu_custom_call.1} parent=47 // pred_check_branch
          %2112 = sbr.rel (%p2110) target = $region52
        $region51: #{tpu_custom_call.1} parent=47 // pred_region
          %2114 = vsyncadd %s2106, 0
          %s2115 = smul.addr %s21, 4
          %s2116 = smul.addr %s2115, 8
          %s2117 = scalar_lea.hbm %s7, %s2116
          %s2118 = sshll.u32 %s2109, 4
          %s2119 = int_to_ptr.vmem [resolvable:$true] %s2118
          %s2120 = sshll.u32 %s2117, 4
          %s2121 = int_to_ptr.hbm [resolvable:$true] %s2120
          %2126 = dma.vmem_to_hbm [thread:$0]  %s2119, 512, %s2121, %s2106, 256, 256, 16
        $region52: #{tpu_custom_call.1} parent=47 // pred_fallthru
          _
      $region48: #{tpu_custom_call.1} parent=5 // pred_fallthru
        _
      %p2127 = scmp.le.s32.totalorder 2, %s16
      // Predicated region
      $region53: #{tpu_custom_call.1} parent=5 // pred_check
        %p2128 = pneg %p2127
      $region54: #{tpu_custom_call.1} parent=5 // pred_check_branch
        %2130 = sbr.rel (%p2128) target = $region56
      $region55: #{tpu_custom_call.1} parent=5 // pred_region
        %s2131 = ssub.s32 %s16, 2
        // Predicated region
        $region57: #{tpu_custom_call.1} parent=55 // pred_check
          %p2132 = pneg %p207
        $region58: #{tpu_custom_call.1} parent=55 // pred_check_branch
          %2134 = sbr.rel (%p2132) target = $region60
        $region59: #{tpu_custom_call.1} parent=55 // pred_region
          %s2135 = sand.u32 %s192, 1
          %s2136 = scalar_lea.sflag [#allocation5], %s2135
          %s2137 = sand.u32 %s192, 1
          %s2138 = smul.addr %s2137, 32
          %s2139 = scalar_lea.vmem [#allocation4], %s2138
          %2141 = dma.done %s2136, 512
        $region60: #{tpu_custom_call.1} parent=55 // pred_fallthru
          _
      $region56: #{tpu_custom_call.1} parent=5 // pred_fallthru
        _
    $region6: #{tpu_custom_call.1} parent=1 // loop_footer
      %s20 = sadd.s32 1, %s16
    $region7: #{tpu_custom_call.1} parent=1 // loop_footer_branch
      %15 = sbr.rel target = $region3
    $region8: #{tpu_custom_call.1} parent=1 // loop_exit
      _
    %2142 = vsyncpa [#allocation5], 1
    %s2143 = scalar_lea.sflag [#allocation5], 1
    %2144 = vsyncpa %s2143, 1

</llo_original>
